<compile_context>
chip_gen: v7x
topology: tpu7x:2x2x1
jax: 0.10.0
libtpu: 0.0.40
codegen_flags: <defaults>
</compile_context>

<pallas_src>
import math

import jax
import jax.numpy as jnp
from jax.experimental import pallas as pl
from jax.experimental.pallas import tpu as pltpu

BN_EPS = 1e-5
NEG_BIG = -1e30          # bias for padded logit columns -> exp() underflows to 0

D_IN = 784               # contraction dim of fc1 (left unpadded; compute is tiny)
H1, H1P = 500, 512       # fc1 out, padded to lane multiple
H2, H2P = 100, 128       # fc2 / BN width, padded
DO, DOP = 10, 128        # fc3 out, padded


def mlp_kernel(x_ref, w1_ref, b1_ref, w2_ref, b2_ref,
               gamma_ref, beta_ref, w3_ref, b3_ref, out_ref):
    # --- fc1 + relu (bf16 operands, f32 accumulate) ---
    x = x_ref[...]                                             # [B, 784] bf16
    h1 = jnp.dot(x, w1_ref[...],
                 preferred_element_type=jnp.float32) + b1_ref[...]
    h1 = jnp.maximum(h1, 0.0)                                  # [B, 512] f32

    # --- fc2 + relu ---
    h2 = jnp.dot(h1.astype(jnp.bfloat16), w2_ref[...],
                 preferred_element_type=jnp.float32) + b2_ref[...]
    h2 = jnp.maximum(h2, 0.0)                                  # [B, 128] f32

    # --- BatchNorm1d (training mode: batch stats over axis 0) + relu ---
    # var = E[h^2] - mean^2 so both reductions are independent.
    mean = jnp.mean(h2, axis=0, keepdims=True)
    mean_sq = jnp.mean(h2 * h2, axis=0, keepdims=True)
    var = jnp.maximum(mean_sq - mean * mean, 0.0)
    bn = (h2 - mean) * jax.lax.rsqrt(var + BN_EPS)
    bn = bn * gamma_ref[...] + beta_ref[...]
    bn = jnp.maximum(bn, 0.0)

    # --- fc3 (final linear) ---
    # Padded output columns carry a -1e30 bias -> effectively masked in softmax.
    logits = jnp.dot(bn.astype(jnp.bfloat16), w3_ref[...],
                     preferred_element_type=jnp.float32) + b3_ref[...]

    # --- log_softmax along dim=1 (padded cols contribute exp(-1e30) == 0) ---
    m = jnp.max(logits, axis=1, keepdims=True)
    shifted = logits - m
    lse = jnp.log(jnp.sum(jnp.exp(shifted), axis=1, keepdims=True))
    out_ref[...] = shifted - lse


def init_params(key):
    """Deterministic PyTorch-style (uniform +/- 1/sqrt(fan_in)) init, true shapes, f32."""
    ks = jax.random.split(key, 6)

    def linear(kw, kb, fan_in, fan_out):
        bound = 1.0 / math.sqrt(float(fan_in))
        w = jax.random.uniform(kw, (fan_in, fan_out), jnp.float32, -bound, bound)
        b = jax.random.uniform(kb, (1, fan_out), jnp.float32, -bound, bound)
        return w, b

    w1, b1 = linear(ks[0], ks[1], D_IN, H1)
    w2, b2 = linear(ks[2], ks[3], H1, H2)
    gamma = jnp.ones((1, H2), jnp.float32)    # BatchNorm1d weight
    beta = jnp.zeros((1, H2), jnp.float32)    # BatchNorm1d bias
    w3, b3 = linear(ks[4], ks[5], H2, DO)
    return (w1, b1, w2, b2, gamma, beta, w3, b3)


def pad_params_for_kernel(params):
    """One-time lane padding (zeros) + bf16 cast of the matmul weights."""
    w1, b1, w2, b2, gamma, beta, w3, b3 = params
    w1p = jnp.zeros((D_IN, H1P), jnp.float32).at[:, :H1].set(w1).astype(jnp.bfloat16)
    b1p = jnp.zeros((1, H1P), jnp.float32).at[:, :H1].set(b1[0])
    w2p = jnp.zeros((H1P, H2P), jnp.float32).at[:H1, :H2].set(w2).astype(jnp.bfloat16)
    b2p = jnp.zeros((1, H2P), jnp.float32).at[:, :H2].set(b2[0])
    gp = jnp.ones((1, H2P), jnp.float32).at[:, :H2].set(gamma[0])
    bp = jnp.zeros((1, H2P), jnp.float32).at[:, :H2].set(beta[0])
    w3p = jnp.zeros((H2P, DOP), jnp.float32).at[:H2, :DO].set(w3).astype(jnp.bfloat16)
    # Padded logit columns get a huge negative bias so log_softmax ignores them.
    b3p = jnp.full((1, DOP), NEG_BIG, jnp.float32).at[:, :DO].set(b3[0])
    return (w1p, b1p, w2p, b2p, gp, bp, w3p, b3p)


def my_model_forward(x, padded_params):
    """x: any shape whose trailing numel reshapes to [B, 784] (e.g. [B,1,28,28])."""
    x2d = x.reshape(-1, D_IN).astype(jnp.bfloat16)
    B = x2d.shape[0]

    vmem = pl.BlockSpec(memory_space=pltpu.MemorySpace.VMEM)
    flops = 2 * B * (D_IN * H1 + H1 * H2 + H2 * DO)
    bytes_accessed = int(
        x2d.size * x2d.dtype.itemsize
        + sum(p.size * p.dtype.itemsize for p in padded_params)
        + B * DOP * 4)

    out_padded = pl.pallas_call(
        mlp_kernel,
        out_shape=jax.ShapeDtypeStruct((B, DOP), jnp.float32),
        in_specs=[vmem] * (1 + len(padded_params)),
        out_specs=vmem,
        compiler_params=pltpu.CompilerParams(vmem_limit_bytes=32 * 1024 * 1024),
        cost_estimate=pl.CostEstimate(flops=flops,
                                      transcendentals=B * DOP,
                                      bytes_accessed=bytes_accessed),
    )(x2d, *padded_params)
    return out_padded[:, :DO]


def reference_forward(x, params):
    """Pure-JAX reference emulating the same bf16 matmul operands / f32 accumulation."""
    w1, b1, w2, b2, gamma, beta, w3, b3 = params
    xb = x.reshape(-1, D_IN).astype(jnp.bfloat16)
    h = jnp.dot(xb, w1.astype(jnp.bfloat16),
                preferred_element_type=jnp.float32) + b1
    h = jnp.maximum(h, 0.0)
    h = jnp.dot(h.astype(jnp.bfloat16), w2.astype(jnp.bfloat16),
                preferred_element_type=jnp.float32) + b2
    h = jnp.maximum(h, 0.0)
    mu = jnp.mean(h, axis=0, keepdims=True)
    var = jnp.maximum(jnp.mean(h * h, axis=0, keepdims=True) - mu * mu, 0.0)
    h = jnp.maximum((h - mu) * jax.lax.rsqrt(var + BN_EPS) * gamma + beta, 0.0)
    logits = jnp.dot(h.astype(jnp.bfloat16), w3.astype(jnp.bfloat16),
                     preferred_element_type=jnp.float32) + b3
    return jax.nn.log_softmax(logits, axis=1)


if __name__ == "__main__":
    key = jax.random.PRNGKey(0)
    kx, kp = jax.random.split(key)

    # Input mirrors MNIST-style tensors that .view(-1, 784) expects.
    x = jax.random.normal(kx, (8, 1, 28, 28), dtype=jnp.float32)
    params = init_params(kp)
    padded_params = pad_params_for_kernel(params)

    out = my_model_forward(x, padded_params)
    out = jax.block_until_ready(out)

    ref = reference_forward(x, params)
    assert out.shape == (8, 10)
    assert jnp.allclose(out, ref, atol=1e-3, rtol=1e-3), "mismatch vs reference"

    print("KERNEL_OK")
</pallas_src>

<mosaic_0001>
module attributes {stable_mosaic.version = 11 : i64} {
  func.func @mlp_kernel(%arg0: memref<8x784xbf16, #tpu.memory_space<vmem>>, %arg1: memref<784x512xbf16, #tpu.memory_space<vmem>>, %arg2: memref<1x512xf32, #tpu.memory_space<vmem>>, %arg3: memref<512x128xbf16, #tpu.memory_space<vmem>>, %arg4: memref<1x128xf32, #tpu.memory_space<vmem>>, %arg5: memref<1x128xf32, #tpu.memory_space<vmem>>, %arg6: memref<1x128xf32, #tpu.memory_space<vmem>>, %arg7: memref<128x128xbf16, #tpu.memory_space<vmem>>, %arg8: memref<1x128xf32, #tpu.memory_space<vmem>>, %arg9: memref<8x128xf32, #tpu.memory_space<vmem>>) attributes {dimension_semantics = [], scalar_prefetch = 0 : i64, scratch_operands = 0 : i64, tpu.core_type = #tpu.core_type<tc>} {
    %c0 = arith.constant 0 : index
    %c0_0 = arith.constant 0 : index
    %0 = vector.load %arg0[%c0, %c0_0] : memref<8x784xbf16, #tpu.memory_space<vmem>>, vector<8x784xbf16>
    %c0_1 = arith.constant 0 : index
    %c0_2 = arith.constant 0 : index
    %1 = vector.load %arg1[%c0_1, %c0_2] : memref<784x512xbf16, #tpu.memory_space<vmem>>, vector<784x512xbf16>
    %cst = arith.constant dense<0.000000e+00> : vector<8x512xf32>
    %2 = tpu.matmul %0, %1, %cst {dimension_numbers = #tpu.dot_dimension_numbers<[1], [0], [0], [1], [0, 0, 1, 1], [], []>} : vector<8x784xbf16>, vector<784x512xbf16>, vector<8x512xf32> -> vector<8x512xf32>
    %c0_3 = arith.constant 0 : index
    %c0_4 = arith.constant 0 : index
    %3 = vector.load %arg2[%c0_3, %c0_4] : memref<1x512xf32, #tpu.memory_space<vmem>>, vector<1x512xf32>
    %4 = vector.broadcast %3 : vector<1x512xf32> to vector<8x512xf32>
    %5 = arith.addf %2, %4 : vector<8x512xf32>
    %cst_5 = arith.constant 0.000000e+00 : f32
    %6 = vector.broadcast %cst_5 : f32 to vector<8x512xf32>
    %7 = arith.maximumf %5, %6 : vector<8x512xf32>
    %8 = arith.truncf %7 : vector<8x512xf32> to vector<8x512xbf16>
    %c0_6 = arith.constant 0 : index
    %c0_7 = arith.constant 0 : index
    %9 = vector.load %arg3[%c0_6, %c0_7] : memref<512x128xbf16, #tpu.memory_space<vmem>>, vector<512x128xbf16>
    %cst_8 = arith.constant dense<0.000000e+00> : vector<8x128xf32>
    %10 = tpu.matmul %8, %9, %cst_8 {dimension_numbers = #tpu.dot_dimension_numbers<[1], [0], [0], [1], [0, 0, 1, 1], [], []>} : vector<8x512xbf16>, vector<512x128xbf16>, vector<8x128xf32> -> vector<8x128xf32>
    %c0_9 = arith.constant 0 : index
    %c0_10 = arith.constant 0 : index
    %11 = vector.load %arg4[%c0_9, %c0_10] : memref<1x128xf32, #tpu.memory_space<vmem>>, vector<1x128xf32>
    %12 = vector.broadcast %11 : vector<1x128xf32> to vector<8x128xf32>
    %13 = arith.addf %10, %12 : vector<8x128xf32>
    %cst_11 = arith.constant 0.000000e+00 : f32
    %14 = vector.broadcast %cst_11 : f32 to vector<8x128xf32>
    %15 = arith.maximumf %13, %14 : vector<8x128xf32>
    %cst_12 = arith.constant dense<0.000000e+00> : vector<128xf32>
    %16 = vector.multi_reduction <add>, %15, %cst_12 [0] : vector<8x128xf32> to vector<128xf32>
    %17 = vector.shape_cast %16 : vector<128xf32> to vector<1x128xf32>
    %cst_13 = arith.constant 8.000000e+00 : f32
    %18 = vector.broadcast %cst_13 : f32 to vector<1x128xf32>
    %19 = arith.divf %17, %18 : vector<1x128xf32>
    %20 = arith.mulf %15, %15 : vector<8x128xf32>
    %cst_14 = arith.constant dense<0.000000e+00> : vector<128xf32>
    %21 = vector.multi_reduction <add>, %20, %cst_14 [0] : vector<8x128xf32> to vector<128xf32>
    %22 = vector.shape_cast %21 : vector<128xf32> to vector<1x128xf32>
    %cst_15 = arith.constant 8.000000e+00 : f32
    %23 = vector.broadcast %cst_15 : f32 to vector<1x128xf32>
    %24 = arith.divf %22, %23 : vector<1x128xf32>
    %25 = arith.mulf %19, %19 : vector<1x128xf32>
    %26 = arith.subf %24, %25 : vector<1x128xf32>
    %cst_16 = arith.constant 0.000000e+00 : f32
    %27 = vector.broadcast %cst_16 : f32 to vector<1x128xf32>
    %28 = arith.maximumf %26, %27 : vector<1x128xf32>
    %29 = vector.broadcast %19 : vector<1x128xf32> to vector<8x128xf32>
    %30 = arith.subf %15, %29 : vector<8x128xf32>
    %cst_17 = arith.constant 9.99999974E-6 : f32
    %31 = vector.broadcast %cst_17 : f32 to vector<1x128xf32>
    %32 = arith.addf %28, %31 : vector<1x128xf32>
    %33 = math.rsqrt %32 : vector<1x128xf32>
    %34 = vector.broadcast %33 : vector<1x128xf32> to vector<8x128xf32>
    %35 = arith.mulf %30, %34 : vector<8x128xf32>
    %c0_18 = arith.constant 0 : index
    %c0_19 = arith.constant 0 : index
    %36 = vector.load %arg5[%c0_18, %c0_19] : memref<1x128xf32, #tpu.memory_space<vmem>>, vector<1x128xf32>
    %37 = vector.broadcast %36 : vector<1x128xf32> to vector<8x128xf32>
    %38 = arith.mulf %35, %37 : vector<8x128xf32>
    %c0_20 = arith.constant 0 : index
    %c0_21 = arith.constant 0 : index
    %39 = vector.load %arg6[%c0_20, %c0_21] : memref<1x128xf32, #tpu.memory_space<vmem>>, vector<1x128xf32>
    %40 = vector.broadcast %39 : vector<1x128xf32> to vector<8x128xf32>
    %41 = arith.addf %38, %40 : vector<8x128xf32>
    %cst_22 = arith.constant 0.000000e+00 : f32
    %42 = vector.broadcast %cst_22 : f32 to vector<8x128xf32>
    %43 = arith.maximumf %41, %42 : vector<8x128xf32>
    %44 = arith.truncf %43 : vector<8x128xf32> to vector<8x128xbf16>
    %c0_23 = arith.constant 0 : index
    %c0_24 = arith.constant 0 : index
    %45 = vector.load %arg7[%c0_23, %c0_24] : memref<128x128xbf16, #tpu.memory_space<vmem>>, vector<128x128xbf16>
    %cst_25 = arith.constant dense<0.000000e+00> : vector<8x128xf32>
    %46 = tpu.matmul %44, %45, %cst_25 {dimension_numbers = #tpu.dot_dimension_numbers<[1], [0], [0], [1], [0, 0, 1, 1], [], []>} : vector<8x128xbf16>, vector<128x128xbf16>, vector<8x128xf32> -> vector<8x128xf32>
    %c0_26 = arith.constant 0 : index
    %c0_27 = arith.constant 0 : index
    %47 = vector.load %arg8[%c0_26, %c0_27] : memref<1x128xf32, #tpu.memory_space<vmem>>, vector<1x128xf32>
    %48 = vector.broadcast %47 : vector<1x128xf32> to vector<8x128xf32>
    %49 = arith.addf %46, %48 : vector<8x128xf32>
    %cst_28 = arith.constant dense<0xFF800000> : vector<8xf32>
    %50 = vector.multi_reduction <maximumf>, %49, %cst_28 [1] : vector<8x128xf32> to vector<8xf32>
    %51 = vector.shape_cast %50 : vector<8xf32> to vector<8x1xf32>
    %52 = vector.broadcast %51 : vector<8x1xf32> to vector<8x128xf32>
    %53 = arith.subf %49, %52 : vector<8x128xf32>
    %54 = math.exp %53 : vector<8x128xf32>
    %cst_29 = arith.constant dense<0.000000e+00> : vector<8xf32>
    %55 = vector.multi_reduction <add>, %54, %cst_29 [1] : vector<8x128xf32> to vector<8xf32>
    %56 = vector.shape_cast %55 : vector<8xf32> to vector<8x1xf32>
    %57 = math.log %56 : vector<8x1xf32>
    %58 = vector.broadcast %57 : vector<8x1xf32> to vector<8x128xf32>
    %59 = arith.subf %53, %58 : vector<8x128xf32>
    %c0_30 = arith.constant 0 : index
    %c0_31 = arith.constant 0 : index
    %60 = vector.load %arg9[%c0_30, %c0_31] : memref<8x128xf32, #tpu.memory_space<vmem>>, vector<8x128xf32>
    tpu.vector_store %arg9[%c0_30, %c0_31], %59 {strides = array<i32>} : memref<8x128xf32, #tpu.memory_space<vmem>>, vector<8x128xf32>,
    return
  }
}

</mosaic_0001>

<llo_original>
// kernel: tpu_custom_call.1
$region0: #{tpu_custom_call.1}
  #allocation0 [shape = 'u32[]', space=smem, size = 0x4, offset = 0x4, fixed_abs, tag = 'smem constant byte address 0x4 - core index']
  #allocation1 [shape = 'u32[144,128]{1,0:T(1,128)}', space=vmem, size = 0x12000, scoped, tag = 'internal scratch']
  %s0 = inlined_call_operand.hbm [shape: bf16[8,784], index: 0, kind: input, shape index: {}]
  %s1 = inlined_call_operand.hbm [shape: bf16[784,512], index: 1, kind: input, shape index: {}]
  %s2 = inlined_call_operand.vmem [shape: f32[1,512], index: 2, kind: input, shape index: {}]
  %s3 = inlined_call_operand.hbm [shape: bf16[512,128], index: 3, kind: input, shape index: {}]
  %s4 = inlined_call_operand.vmem [shape: f32[1,128], index: 4, kind: input, shape index: {}]
  %s5 = inlined_call_operand.vmem [shape: f32[1,128], index: 5, kind: input, shape index: {}]
  %s6 = inlined_call_operand.vmem [shape: f32[1,128], index: 6, kind: input, shape index: {}]
  %s7 = inlined_call_operand.hbm [shape: bf16[128,128], index: 7, kind: input, shape index: {}]
  %s8 = inlined_call_operand.vmem [shape: f32[1,128], index: 8, kind: input, shape index: {}]
  %s9 = inlined_call_operand.hbm [shape: f32[8,128], index: 9, kind: output, shape index: {}]
  %s10 = sld [smem:[#allocation0]]
  $region62: #{tpu_custom_call.1} parent=0
    _
  %s12 = ssub.s32 1, %s10
  %s13 = scalar_select 0, %s12, %s10
  $region1: #{tpu_custom_call.1} parent=0
    #allocation2 [shape = 'u8[14336]{0}', space=vmem, size = 0x3800, scoped, tag = 'input window, operand 0, single buffered']
    #allocation3 [shape = 's32[1]{0}', space=sflag, size = 0x4, scoped, tag = 'scoped memory for tpu_custom_call.1']
    #allocation4 [shape = 's32[1]{0}', space=sflag, size = 0x4, scoped, tag = 'scoped memory for tpu_custom_call.1']
    #allocation5 [shape = 'u8[802816]{0}', space=vmem, size = 0xc4000, scoped, tag = 'input window, operand 1, single buffered']
    #allocation6 [shape = 's32[1]{0}', space=sflag, size = 0x4, scoped, tag = 'scoped memory for tpu_custom_call.1']
    #allocation7 [shape = 'u8[131072]{0}', space=vmem, size = 0x20000, scoped, tag = 'input window, operand 3, single buffered']
    #allocation8 [shape = 'u8[32768]{0}', space=vmem, size = 0x8000, scoped, tag = 'input window, operand 7, single buffered']
    #allocation9 [shape = 's32[1]{0}', space=sflag, size = 0x4, scoped, tag = 'scoped memory for tpu_custom_call.1']
    #allocation10 [shape = 'u8[4096]{0}', space=vmem, size = 0x1000, scoped, tag = 'output window, operand 0, single buffered']
    %14 = vsyncpa [#allocation3], 0
    %15 = vsyncpa [#allocation6], 0
    %16 = vsyncpa [#allocation9], 0
    %17 = vsyncpa [#allocation4], 0
    // Predicated region
    $region2: #{tpu_custom_call.1} parent=1 // pred_check
      _
    $region3: #{tpu_custom_call.1} parent=1 // pred_check_branch
      %19 = sbr.rel (0) target = $region5
    $region4: #{tpu_custom_call.1} parent=1 // pred_region
      %s21 = ssub.s32 448, 448
      %22 = vsyncadd [#allocation3], %s21
      %s24 = sshll.u32 [#allocation2], 4
      %s25 = int_to_ptr.vmem [resolvable:$true] %s24
      %27 = dma.hbm_to_vmem [thread:$0]  %s0, 448, %s25, [#allocation3]
    $region5: #{tpu_custom_call.1} parent=1 // pred_fallthru
      _
    // Predicated region
    $region6: #{tpu_custom_call.1} parent=1 // pred_check
      _
    $region7: #{tpu_custom_call.1} parent=1 // pred_check_branch
      %29 = sbr.rel (0) target = $region9
    $region8: #{tpu_custom_call.1} parent=1 // pred_region
      %s31 = ssub.s32 25088, 25088
      %32 = vsyncadd [#allocation6], %s31
      %s33 = sshll.u32 [#allocation5], 4
      %s34 = int_to_ptr.vmem [resolvable:$true] %s33
      %39 = dma.hbm_to_vmem [thread:$0]  %s1, 25088, %s34, [#allocation6], 256, 256, 16
    $region9: #{tpu_custom_call.1} parent=1 // pred_fallthru
      _
    // Predicated region
    $region10: #{tpu_custom_call.1} parent=1 // pred_check
      _
    $region11: #{tpu_custom_call.1} parent=1 // pred_check_branch
      %41 = sbr.rel (0) target = $region13
    $region12: #{tpu_custom_call.1} parent=1 // pred_region
      _
    $region13: #{tpu_custom_call.1} parent=1 // pred_fallthru
      _
    // Predicated region
    $region14: #{tpu_custom_call.1} parent=1 // pred_check
      _
    $region15: #{tpu_custom_call.1} parent=1 // pred_check_branch
      %43 = sbr.rel (0) target = $region17
    $region16: #{tpu_custom_call.1} parent=1 // pred_region
      %s45 = ssub.s32 4096, 4096
      %46 = vsyncadd [#allocation6], %s45
      %s47 = sshll.u32 [#allocation7], 4
      %s48 = int_to_ptr.vmem [resolvable:$true] %s47
      %53 = dma.hbm_to_vmem [thread:$0]  %s3, 4096, %s48, [#allocation6], 64, 64, 4
    $region17: #{tpu_custom_call.1} parent=1 // pred_fallthru
      _
    // Predicated region
    $region18: #{tpu_custom_call.1} parent=1 // pred_check
      _
    $region19: #{tpu_custom_call.1} parent=1 // pred_check_branch
      %55 = sbr.rel (0) target = $region21
    $region20: #{tpu_custom_call.1} parent=1 // pred_region
      _
    $region21: #{tpu_custom_call.1} parent=1 // pred_fallthru
      _
    // Predicated region
    $region22: #{tpu_custom_call.1} parent=1 // pred_check
      _
    $region23: #{tpu_custom_call.1} parent=1 // pred_check_branch
      %57 = sbr.rel (0) target = $region25
    $region24: #{tpu_custom_call.1} parent=1 // pred_region
      _
    $region25: #{tpu_custom_call.1} parent=1 // pred_fallthru
      _
    // Predicated region
    $region26: #{tpu_custom_call.1} parent=1 // pred_check
      _
    $region27: #{tpu_custom_call.1} parent=1 // pred_check_branch
      %59 = sbr.rel (0) target = $region29
    $region28: #{tpu_custom_call.1} parent=1 // pred_region
      _
    $region29: #{tpu_custom_call.1} parent=1 // pred_fallthru
      _
    // Predicated region
    $region30: #{tpu_custom_call.1} parent=1 // pred_check
      _
    $region31: #{tpu_custom_call.1} parent=1 // pred_check_branch
      %61 = sbr.rel (0) target = $region33
    $region32: #{tpu_custom_call.1} parent=1 // pred_region
      %s63 = ssub.s32 1024, 1024
      %64 = vsyncadd [#allocation9], %s63
      %s65 = sshll.u32 [#allocation8], 4
      %s66 = int_to_ptr.vmem [resolvable:$true] %s65
      %71 = dma.hbm_to_vmem [thread:$0]  %s7, 1024, %s66, [#allocation9], 64, 64, 4
    $region33: #{tpu_custom_call.1} parent=1 // pred_fallthru
      _
    // Predicated region
    $region34: #{tpu_custom_call.1} parent=1 // pred_check
      _
    $region35: #{tpu_custom_call.1} parent=1 // pred_check_branch
      %73 = sbr.rel (0) target = $region37
    $region36: #{tpu_custom_call.1} parent=1 // pred_region
      _
    $region37: #{tpu_custom_call.1} parent=1 // pred_fallthru
      _
    // Predicated region
    $region38: #{tpu_custom_call.1} parent=1 // pred_check
      _
    $region39: #{tpu_custom_call.1} parent=1 // pred_check_branch
      %75 = sbr.rel (0) target = $region41
    $region40: #{tpu_custom_call.1} parent=1 // pred_region
      %76 = dma.done [#allocation3], 448
    $region41: #{tpu_custom_call.1} parent=1 // pred_fallthru
      _
    // Predicated region
    $region42: #{tpu_custom_call.1} parent=1 // pred_check
      _
    $region43: #{tpu_custom_call.1} parent=1 // pred_check_branch
      %78 = sbr.rel (0) target = $region45
    $region44: #{tpu_custom_call.1} parent=1 // pred_region
      %79 = dma.done [#allocation6], 25088
    $region45: #{tpu_custom_call.1} parent=1 // pred_fallthru
      _
    // Predicated region
    $region46: #{tpu_custom_call.1} parent=1 // pred_check
      _
    $region47: #{tpu_custom_call.1} parent=1 // pred_check_branch
      %81 = sbr.rel (0) target = $region49
    $region48: #{tpu_custom_call.1} parent=1 // pred_region
      %82 = dma.done [#allocation6], 4096
    $region49: #{tpu_custom_call.1} parent=1 // pred_fallthru
      _
    // Predicated region
    $region50: #{tpu_custom_call.1} parent=1 // pred_check
      _
    $region51: #{tpu_custom_call.1} parent=1 // pred_check_branch
      %84 = sbr.rel (0) target = $region53
    $region52: #{tpu_custom_call.1} parent=1 // pred_region
      %85 = dma.done [#allocation9], 1024
    $region53: #{tpu_custom_call.1} parent=1 // pred_fallthru
      _
    %v87 = vld [vmem:[#allocation2] sm:$0xff]
    %v88 = vld [vmem:[#allocation2 + $0x8] sm:$0xff]
    %v89 = vld [vmem:[#allocation2 + $0x10] sm:$0xff]
    %v90 = vld [vmem:[#allocation2 + $0x18] sm:$0xf]
    %v91 = vld [vmem:[#allocation5] sm:$0xff]
    %v92 = vld [vmem:[#allocation5 + $0x8] sm:$0xff]
    %v93 = vld [vmem:[#allocation5 + $0x10] sm:$0xff]
    %v94 = vld [vmem:[#allocation5 + $0x18] sm:$0xff]
    %v95 = vld [vmem:[#allocation5 + $0x20] sm:$0xff]
    %v96 = vld [vmem:[#allocation5 + $0x28] sm:$0xff]
    %v97 = vld [vmem:[#allocation5 + $0x30] sm:$0xff]
    %v98 = vld [vmem:[#allocation5 + $0x38] sm:$0xff]
    %v99 = vld [vmem:[#allocation5 + $0x40] sm:$0xff]
    %v100 = vld [vmem:[#allocation5 + $0x48] sm:$0xff]
    %v101 = vld [vmem:[#allocation5 + $0x50] sm:$0xff]
    %v102 = vld [vmem:[#allocation5 + $0x58] sm:$0xff]
    %v103 = vld [vmem:[#allocation5 + $0x60] sm:$0xff]
    %v104 = vld [vmem:[#allocation5 + $0x68] sm:$0xff]
    %v105 = vld [vmem:[#allocation5 + $0x70] sm:$0xff]
    %v106 = vld [vmem:[#allocation5 + $0x78] sm:$0xff]
    %v107 = vld [vmem:[#allocation5 + $0x80] sm:$0xff]
    %v108 = vld [vmem:[#allocation5 + $0x88] sm:$0xff]
    %v109 = vld [vmem:[#allocation5 + $0x90] sm:$0xff]
    %v110 = vld [vmem:[#allocation5 + $0x98] sm:$0xff]
    %v111 = vld [vmem:[#allocation5 + $0xa0] sm:$0xff]
    %v112 = vld [vmem:[#allocation5 + $0xa8] sm:$0xff]
    %v113 = vld [vmem:[#allocation5 + $0xb0] sm:$0xff]
    %v114 = vld [vmem:[#allocation5 + $0xb8] sm:$0xff]
    %v115 = vld [vmem:[#allocation5 + $0xc0] sm:$0xff]
    %v116 = vld [vmem:[#allocation5 + $0xc8] sm:$0xff]
    %v117 = vld [vmem:[#allocation5 + $0xd0] sm:$0xff]
    %v118 = vld [vmem:[#allocation5 + $0xd8] sm:$0xff]
    %v119 = vld [vmem:[#allocation5 + $0xe0] sm:$0xff]
    %v120 = vld [vmem:[#allocation5 + $0xe8] sm:$0xff]
    %v121 = vld [vmem:[#allocation5 + $0xf0] sm:$0xff]
    %v122 = vld [vmem:[#allocation5 + $0xf8] sm:$0xff]
    %v123 = vld [vmem:[#allocation5 + $0x100] sm:$0xff]
    %v124 = vld [vmem:[#allocation5 + $0x108] sm:$0xff]
    %v125 = vld [vmem:[#allocation5 + $0x110] sm:$0xff]
    %v126 = vld [vmem:[#allocation5 + $0x118] sm:$0xff]
    %v127 = vld [vmem:[#allocation5 + $0x120] sm:$0xff]
    %v128 = vld [vmem:[#allocation5 + $0x128] sm:$0xff]
    %v129 = vld [vmem:[#allocation5 + $0x130] sm:$0xff]
    %v130 = vld [vmem:[#allocation5 + $0x138] sm:$0xff]
    %v131 = vld [vmem:[#allocation5 + $0x140] sm:$0xff]
    %v132 = vld [vmem:[#allocation5 + $0x148] sm:$0xff]
    %v133 = vld [vmem:[#allocation5 + $0x150] sm:$0xff]
    %v134 = vld [vmem:[#allocation5 + $0x158] sm:$0xff]
    %v135 = vld [vmem:[#allocation5 + $0x160] sm:$0xff]
    %v136 = vld [vmem:[#allocation5 + $0x168] sm:$0xff]
    %v137 = vld [vmem:[#allocation5 + $0x170] sm:$0xff]
    %v138 = vld [vmem:[#allocation5 + $0x178] sm:$0xff]
    %v139 = vld [vmem:[#allocation5 + $0x180] sm:$0xff]
    %v140 = vld [vmem:[#allocation5 + $0x188] sm:$0xff]
    %v141 = vld [vmem:[#allocation5 + $0x190] sm:$0xff]
    %v142 = vld [vmem:[#allocation5 + $0x198] sm:$0xff]
    %v143 = vld [vmem:[#allocation5 + $0x1a0] sm:$0xff]
    %v144 = vld [vmem:[#allocation5 + $0x1a8] sm:$0xff]
    %v145 = vld [vmem:[#allocation5 + $0x1b0] sm:$0xff]
    %v146 = vld [vmem:[#allocation5 + $0x1b8] sm:$0xff]
    %v147 = vld [vmem:[#allocation5 + $0x1c0] sm:$0xff]
    %v148 = vld [vmem:[#allocation5 + $0x1c8] sm:$0xff]
    %v149 = vld [vmem:[#allocation5 + $0x1d0] sm:$0xff]
    %v150 = vld [vmem:[#allocation5 + $0x1d8] sm:$0xff]
    %v151 = vld [vmem:[#allocation5 + $0x1e0] sm:$0xff]
    %v152 = vld [vmem:[#allocation5 + $0x1e8] sm:$0xff]
    %v153 = vld [vmem:[#allocation5 + $0x1f0] sm:$0xff]
    %v154 = vld [vmem:[#allocation5 + $0x1f8] sm:$0xff]
    %v155 = vld [vmem:[#allocation5 + $0x200] sm:$0xff]
    %v156 = vld [vmem:[#allocation5 + $0x208] sm:$0xff]
    %v157 = vld [vmem:[#allocation5 + $0x210] sm:$0xff]
    %v158 = vld [vmem:[#allocation5 + $0x218] sm:$0xff]
    %v159 = vld [vmem:[#allocation5 + $0x220] sm:$0xff]
    %v160 = vld [vmem:[#allocation5 + $0x228] sm:$0xff]
    %v161 = vld [vmem:[#allocation5 + $0x230] sm:$0xff]
    %v162 = vld [vmem:[#allocation5 + $0x238] sm:$0xff]
    %v163 = vld [vmem:[#allocation5 + $0x240] sm:$0xff]
    %v164 = vld [vmem:[#allocation5 + $0x248] sm:$0xff]
    %v165 = vld [vmem:[#allocation5 + $0x250] sm:$0xff]
    %v166 = vld [vmem:[#allocation5 + $0x258] sm:$0xff]
    %v167 = vld [vmem:[#allocation5 + $0x260] sm:$0xff]
    %v168 = vld [vmem:[#allocation5 + $0x268] sm:$0xff]
    %v169 = vld [vmem:[#allocation5 + $0x270] sm:$0xff]
    %v170 = vld [vmem:[#allocation5 + $0x278] sm:$0xff]
    %v171 = vld [vmem:[#allocation5 + $0x280] sm:$0xff]
    %v172 = vld [vmem:[#allocation5 + $0x288] sm:$0xff]
    %v173 = vld [vmem:[#allocation5 + $0x290] sm:$0xff]
    %v174 = vld [vmem:[#allocation5 + $0x298] sm:$0xff]
    %v175 = vld [vmem:[#allocation5 + $0x2a0] sm:$0xff]
    %v176 = vld [vmem:[#allocation5 + $0x2a8] sm:$0xff]
    %v177 = vld [vmem:[#allocation5 + $0x2b0] sm:$0xff]
    %v178 = vld [vmem:[#allocation5 + $0x2b8] sm:$0xff]
    %v179 = vld [vmem:[#allocation5 + $0x2c0] sm:$0xff]
    %v180 = vld [vmem:[#allocation5 + $0x2c8] sm:$0xff]
    %v181 = vld [vmem:[#allocation5 + $0x2d0] sm:$0xff]
    %v182 = vld [vmem:[#allocation5 + $0x2d8] sm:$0xff]
    %v183 = vld [vmem:[#allocation5 + $0x2e0] sm:$0xff]
    %v184 = vld [vmem:[#allocation5 + $0x2e8] sm:$0xff]
    %v185 = vld [vmem:[#allocation5 + $0x2f0] sm:$0xff]
    %v186 = vld [vmem:[#allocation5 + $0x2f8] sm:$0xff]
    %v187 = vld [vmem:[#allocation5 + $0x300] sm:$0xff]
    %v188 = vld [vmem:[#allocation5 + $0x308] sm:$0xff]
    %v189 = vld [vmem:[#allocation5 + $0x310] sm:$0xff]
    %v190 = vld [vmem:[#allocation5 + $0x318] sm:$0xff]
    %v191 = vld [vmem:[#allocation5 + $0x320] sm:$0xff]
    %v192 = vld [vmem:[#allocation5 + $0x328] sm:$0xff]
    %v193 = vld [vmem:[#allocation5 + $0x330] sm:$0xff]
    %v194 = vld [vmem:[#allocation5 + $0x338] sm:$0xff]
    %v195 = vld [vmem:[#allocation5 + $0x340] sm:$0xff]
    %v196 = vld [vmem:[#allocation5 + $0x348] sm:$0xff]
    %v197 = vld [vmem:[#allocation5 + $0x350] sm:$0xff]
    %v198 = vld [vmem:[#allocation5 + $0x358] sm:$0xff]
    %v199 = vld [vmem:[#allocation5 + $0x360] sm:$0xff]
    %v200 = vld [vmem:[#allocation5 + $0x368] sm:$0xff]
    %v201 = vld [vmem:[#allocation5 + $0x370] sm:$0xff]
    %v202 = vld [vmem:[#allocation5 + $0x378] sm:$0xff]
    %v203 = vld [vmem:[#allocation5 + $0x380] sm:$0xff]
    %v204 = vld [vmem:[#allocation5 + $0x388] sm:$0xff]
    %v205 = vld [vmem:[#allocation5 + $0x390] sm:$0xff]
    %v206 = vld [vmem:[#allocation5 + $0x398] sm:$0xff]
    %v207 = vld [vmem:[#allocation5 + $0x3a0] sm:$0xff]
    %v208 = vld [vmem:[#allocation5 + $0x3a8] sm:$0xff]
    %v209 = vld [vmem:[#allocation5 + $0x3b0] sm:$0xff]
    %v210 = vld [vmem:[#allocation5 + $0x3b8] sm:$0xff]
    %v211 = vld [vmem:[#allocation5 + $0x3c0] sm:$0xff]
    %v212 = vld [vmem:[#allocation5 + $0x3c8] sm:$0xff]
    %v213 = vld [vmem:[#allocation5 + $0x3d0] sm:$0xff]
    %v214 = vld [vmem:[#allocation5 + $0x3d8] sm:$0xff]
    %v215 = vld [vmem:[#allocation5 + $0x3e0] sm:$0xff]
    %v216 = vld [vmem:[#allocation5 + $0x3e8] sm:$0xff]
    %v217 = vld [vmem:[#allocation5 + $0x3f0] sm:$0xff]
    %v218 = vld [vmem:[#allocation5 + $0x3f8] sm:$0xff]
    %v219 = vld [vmem:[#allocation5 + $0x400] sm:$0xff]
    %v220 = vld [vmem:[#allocation5 + $0x408] sm:$0xff]
    %v221 = vld [vmem:[#allocation5 + $0x410] sm:$0xff]
    %v222 = vld [vmem:[#allocation5 + $0x418] sm:$0xff]
    %v223 = vld [vmem:[#allocation5 + $0x420] sm:$0xff]
    %v224 = vld [vmem:[#allocation5 + $0x428] sm:$0xff]
    %v225 = vld [vmem:[#allocation5 + $0x430] sm:$0xff]
    %v226 = vld [vmem:[#allocation5 + $0x438] sm:$0xff]
    %v227 = vld [vmem:[#allocation5 + $0x440] sm:$0xff]
    %v228 = vld [vmem:[#allocation5 + $0x448] sm:$0xff]
    %v229 = vld [vmem:[#allocation5 + $0x450] sm:$0xff]
    %v230 = vld [vmem:[#allocation5 + $0x458] sm:$0xff]
    %v231 = vld [vmem:[#allocation5 + $0x460] sm:$0xff]
    %v232 = vld [vmem:[#allocation5 + $0x468] sm:$0xff]
    %v233 = vld [vmem:[#allocation5 + $0x470] sm:$0xff]
    %v234 = vld [vmem:[#allocation5 + $0x478] sm:$0xff]
    %v235 = vld [vmem:[#allocation5 + $0x480] sm:$0xff]
    %v236 = vld [vmem:[#allocation5 + $0x488] sm:$0xff]
    %v237 = vld [vmem:[#allocation5 + $0x490] sm:$0xff]
    %v238 = vld [vmem:[#allocation5 + $0x498] sm:$0xff]
    %v239 = vld [vmem:[#allocation5 + $0x4a0] sm:$0xff]
    %v240 = vld [vmem:[#allocation5 + $0x4a8] sm:$0xff]
    %v241 = vld [vmem:[#allocation5 + $0x4b0] sm:$0xff]
    %v242 = vld [vmem:[#allocation5 + $0x4b8] sm:$0xff]
    %v243 = vld [vmem:[#allocation5 + $0x4c0] sm:$0xff]
    %v244 = vld [vmem:[#allocation5 + $0x4c8] sm:$0xff]
    %v245 = vld [vmem:[#allocation5 + $0x4d0] sm:$0xff]
    %v246 = vld [vmem:[#allocation5 + $0x4d8] sm:$0xff]
    %v247 = vld [vmem:[#allocation5 + $0x4e0] sm:$0xff]
    %v248 = vld [vmem:[#allocation5 + $0x4e8] sm:$0xff]
    %v249 = vld [vmem:[#allocation5 + $0x4f0] sm:$0xff]
    %v250 = vld [vmem:[#allocation5 + $0x4f8] sm:$0xff]
    %v251 = vld [vmem:[#allocation5 + $0x500] sm:$0xff]
    %v252 = vld [vmem:[#allocation5 + $0x508] sm:$0xff]
    %v253 = vld [vmem:[#allocation5 + $0x510] sm:$0xff]
    %v254 = vld [vmem:[#allocation5 + $0x518] sm:$0xff]
    %v255 = vld [vmem:[#allocation5 + $0x520] sm:$0xff]
    %v256 = vld [vmem:[#allocation5 + $0x528] sm:$0xff]
    %v257 = vld [vmem:[#allocation5 + $0x530] sm:$0xff]
    %v258 = vld [vmem:[#allocation5 + $0x538] sm:$0xff]
    %v259 = vld [vmem:[#allocation5 + $0x540] sm:$0xff]
    %v260 = vld [vmem:[#allocation5 + $0x548] sm:$0xff]
    %v261 = vld [vmem:[#allocation5 + $0x550] sm:$0xff]
    %v262 = vld [vmem:[#allocation5 + $0x558] sm:$0xff]
    %v263 = vld [vmem:[#allocation5 + $0x560] sm:$0xff]
    %v264 = vld [vmem:[#allocation5 + $0x568] sm:$0xff]
    %v265 = vld [vmem:[#allocation5 + $0x570] sm:$0xff]
    %v266 = vld [vmem:[#allocation5 + $0x578] sm:$0xff]
    %v267 = vld [vmem:[#allocation5 + $0x580] sm:$0xff]
    %v268 = vld [vmem:[#allocation5 + $0x588] sm:$0xff]
    %v269 = vld [vmem:[#allocation5 + $0x590] sm:$0xff]
    %v270 = vld [vmem:[#allocation5 + $0x598] sm:$0xff]
    %v271 = vld [vmem:[#allocation5 + $0x5a0] sm:$0xff]
    %v272 = vld [vmem:[#allocation5 + $0x5a8] sm:$0xff]
    %v273 = vld [vmem:[#allocation5 + $0x5b0] sm:$0xff]
    %v274 = vld [vmem:[#allocation5 + $0x5b8] sm:$0xff]
    %v275 = vld [vmem:[#allocation5 + $0x5c0] sm:$0xff]
    %v276 = vld [vmem:[#allocation5 + $0x5c8] sm:$0xff]
    %v277 = vld [vmem:[#allocation5 + $0x5d0] sm:$0xff]
    %v278 = vld [vmem:[#allocation5 + $0x5d8] sm:$0xff]
    %v279 = vld [vmem:[#allocation5 + $0x5e0] sm:$0xff]
    %v280 = vld [vmem:[#allocation5 + $0x5e8] sm:$0xff]
    %v281 = vld [vmem:[#allocation5 + $0x5f0] sm:$0xff]
    %v282 = vld [vmem:[#allocation5 + $0x5f8] sm:$0xff]
    %v283 = vld [vmem:[#allocation5 + $0x600] sm:$0xff]
    %v284 = vld [vmem:[#allocation5 + $0x608] sm:$0xff]
    %v285 = vld [vmem:[#allocation5 + $0x610] sm:$0xff]
    %v286 = vld [vmem:[#allocation5 + $0x618] sm:$0xff]
    %v287 = vld [vmem:[%s2] sm:$0xf]
    %v289 = vlaneseq
    %v290 = vshrl.u32 %v289, 7
    %v291 = vsub.s32 0, %v290
    %v292 = vrot.slane %v287, %v291
    %v293 = vlaneseq
    %v294 = vshrl.u32 %v293, 7
    %v295 = vsub.s32 1, %v294
    %v296 = vrot.slane %v287, %v295
    %v297 = vlaneseq
    %v298 = vshrl.u32 %v297, 7
    %v299 = vsub.s32 2, %v298
    %v300 = vrot.slane %v287, %v299
    %v301 = vlaneseq
    %v302 = vshrl.u32 %v301, 7
    %v303 = vsub.s32 3, %v302
    %v304 = vrot.slane %v287, %v303
    %v313 = vunpack.c.l.b16 %v87
    %v314 = vunpack.c.h.b16 %v87
    %v315 = vunpack.c.l.b16 %v88
    %v316 = vunpack.c.h.b16 %v88
    %v317 = vunpack.c.l.b16 %v89
    %v318 = vunpack.c.h.b16 %v89
    %v319 = vunpack.c.l.b16 %v90
    %v320 = vpack.c.b16 %v313, %v313
    %v321 = vpack.c.b16 %v314, %v314
    %v322 = vpack.c.b16 %v315, %v315
    %v323 = vpack.c.b16 %v316, %v316
    %v324 = vpack.c.b16 %v317, %v317
    %v325 = vpack.c.b16 %v318, %v318
    %v326 = vpack.c.b16 %v319, %v319
    %v529 = vunpack.c.l.b16 %v91
    %v530 = vunpack.c.h.b16 %v91
    %v531 = vunpack.c.l.b16 %v92
    %v532 = vunpack.c.h.b16 %v92
    %v533 = vunpack.c.l.b16 %v93
    %v534 = vunpack.c.h.b16 %v93
    %v535 = vunpack.c.l.b16 %v94
    %v536 = vunpack.c.h.b16 %v94
    %v537 = vunpack.c.l.b16 %v95
    %v538 = vunpack.c.h.b16 %v95
    %v539 = vunpack.c.l.b16 %v96
    %v540 = vunpack.c.h.b16 %v96
    %v541 = vunpack.c.l.b16 %v97
    %v542 = vunpack.c.h.b16 %v97
    %v543 = vunpack.c.l.b16 %v98
    %v544 = vunpack.c.h.b16 %v98
    %v545 = vunpack.c.l.b16 %v99
    %v546 = vunpack.c.h.b16 %v99
    %v547 = vunpack.c.l.b16 %v100
    %v548 = vunpack.c.h.b16 %v100
    %v549 = vunpack.c.l.b16 %v101
    %v550 = vunpack.c.h.b16 %v101
    %v551 = vunpack.c.l.b16 %v102
    %v552 = vunpack.c.h.b16 %v102
    %v553 = vunpack.c.l.b16 %v103
    %v554 = vunpack.c.h.b16 %v103
    %v555 = vunpack.c.l.b16 %v104
    %v556 = vunpack.c.h.b16 %v104
    %v557 = vunpack.c.l.b16 %v105
    %v558 = vunpack.c.h.b16 %v105
    %v559 = vunpack.c.l.b16 %v106
    %v560 = vunpack.c.h.b16 %v106
    %v561 = vunpack.c.l.b16 %v107
    %v562 = vunpack.c.h.b16 %v107
    %v563 = vunpack.c.l.b16 %v108
    %v564 = vunpack.c.h.b16 %v108
    %v565 = vunpack.c.l.b16 %v109
    %v566 = vunpack.c.h.b16 %v109
    %v567 = vunpack.c.l.b16 %v110
    %v568 = vunpack.c.h.b16 %v110
    %v569 = vunpack.c.l.b16 %v111
    %v570 = vunpack.c.h.b16 %v111
    %v571 = vunpack.c.l.b16 %v112
    %v572 = vunpack.c.h.b16 %v112
    %v573 = vunpack.c.l.b16 %v113
    %v574 = vunpack.c.h.b16 %v113
    %v575 = vunpack.c.l.b16 %v114
    %v576 = vunpack.c.h.b16 %v114
    %v577 = vunpack.c.l.b16 %v115
    %v578 = vunpack.c.h.b16 %v115
    %v579 = vunpack.c.l.b16 %v116
    %v580 = vunpack.c.h.b16 %v116
    %v581 = vunpack.c.l.b16 %v117
    %v582 = vunpack.c.h.b16 %v117
    %v583 = vunpack.c.l.b16 %v118
    %v584 = vunpack.c.h.b16 %v118
    %v585 = vunpack.c.l.b16 %v119
    %v586 = vunpack.c.h.b16 %v119
    %v587 = vunpack.c.l.b16 %v120
    %v588 = vunpack.c.h.b16 %v120
    %v589 = vunpack.c.l.b16 %v121
    %v590 = vunpack.c.h.b16 %v121
    %v591 = vunpack.c.l.b16 %v122
    %v592 = vunpack.c.h.b16 %v122
    %v593 = vunpack.c.l.b16 %v123
    %v594 = vunpack.c.h.b16 %v123
    %v595 = vunpack.c.l.b16 %v124
    %v596 = vunpack.c.h.b16 %v124
    %v597 = vunpack.c.l.b16 %v125
    %v598 = vunpack.c.h.b16 %v125
    %v599 = vunpack.c.l.b16 %v126
    %v600 = vunpack.c.h.b16 %v126
    %v601 = vunpack.c.l.b16 %v127
    %v602 = vunpack.c.h.b16 %v127
    %v603 = vunpack.c.l.b16 %v128
    %v604 = vunpack.c.h.b16 %v128
    %v605 = vunpack.c.l.b16 %v129
    %v606 = vunpack.c.h.b16 %v129
    %v607 = vunpack.c.l.b16 %v130
    %v608 = vunpack.c.h.b16 %v130
    %v609 = vunpack.c.l.b16 %v131
    %v610 = vunpack.c.h.b16 %v131
    %v611 = vunpack.c.l.b16 %v132
    %v612 = vunpack.c.h.b16 %v132
    %v613 = vunpack.c.l.b16 %v133
    %v614 = vunpack.c.h.b16 %v133
    %v615 = vunpack.c.l.b16 %v134
    %v616 = vunpack.c.h.b16 %v134
    %v617 = vunpack.c.l.b16 %v135
    %v618 = vunpack.c.h.b16 %v135
    %v619 = vunpack.c.l.b16 %v136
    %v620 = vunpack.c.h.b16 %v136
    %v621 = vunpack.c.l.b16 %v137
    %v622 = vunpack.c.h.b16 %v137
    %v623 = vunpack.c.l.b16 %v138
    %v624 = vunpack.c.h.b16 %v138
    %v625 = vunpack.c.l.b16 %v139
    %v626 = vunpack.c.h.b16 %v139
    %v627 = vunpack.c.l.b16 %v140
    %v628 = vunpack.c.h.b16 %v140
    %v629 = vunpack.c.l.b16 %v141
    %v630 = vunpack.c.h.b16 %v141
    %v631 = vunpack.c.l.b16 %v142
    %v632 = vunpack.c.h.b16 %v142
    %v633 = vunpack.c.l.b16 %v143
    %v634 = vunpack.c.h.b16 %v143
    %v635 = vunpack.c.l.b16 %v144
    %v636 = vunpack.c.h.b16 %v144
    %v637 = vunpack.c.l.b16 %v145
    %v638 = vunpack.c.h.b16 %v145
    %v639 = vunpack.c.l.b16 %v146
    %v640 = vunpack.c.h.b16 %v146
    %v641 = vunpack.c.l.b16 %v147
    %v642 = vunpack.c.h.b16 %v147
    %v643 = vunpack.c.l.b16 %v148
    %v644 = vunpack.c.h.b16 %v148
    %v645 = vunpack.c.l.b16 %v149
    %v646 = vunpack.c.h.b16 %v149
    %v647 = vunpack.c.l.b16 %v150
    %v648 = vunpack.c.h.b16 %v150
    %v649 = vunpack.c.l.b16 %v151
    %v650 = vunpack.c.h.b16 %v151
    %v651 = vunpack.c.l.b16 %v152
    %v652 = vunpack.c.h.b16 %v152
    %v653 = vunpack.c.l.b16 %v153
    %v654 = vunpack.c.h.b16 %v153
    %v655 = vunpack.c.l.b16 %v154
    %v656 = vunpack.c.h.b16 %v154
    %v657 = vunpack.c.l.b16 %v155
    %v658 = vunpack.c.h.b16 %v155
    %v659 = vunpack.c.l.b16 %v156
    %v660 = vunpack.c.h.b16 %v156
    %v661 = vunpack.c.l.b16 %v157
    %v662 = vunpack.c.h.b16 %v157
    %v663 = vunpack.c.l.b16 %v158
    %v664 = vunpack.c.h.b16 %v158
    %v665 = vunpack.c.l.b16 %v159
    %v666 = vunpack.c.h.b16 %v159
    %v667 = vunpack.c.l.b16 %v160
    %v668 = vunpack.c.h.b16 %v160
    %v669 = vunpack.c.l.b16 %v161
    %v670 = vunpack.c.h.b16 %v161
    %v671 = vunpack.c.l.b16 %v162
    %v672 = vunpack.c.h.b16 %v162
    %v673 = vunpack.c.l.b16 %v163
    %v674 = vunpack.c.h.b16 %v163
    %v675 = vunpack.c.l.b16 %v164
    %v676 = vunpack.c.h.b16 %v164
    %v677 = vunpack.c.l.b16 %v165
    %v678 = vunpack.c.h.b16 %v165
    %v679 = vunpack.c.l.b16 %v166
    %v680 = vunpack.c.h.b16 %v166
    %v681 = vunpack.c.l.b16 %v167
    %v682 = vunpack.c.h.b16 %v167
    %v683 = vunpack.c.l.b16 %v168
    %v684 = vunpack.c.h.b16 %v168
    %v685 = vunpack.c.l.b16 %v169
    %v686 = vunpack.c.h.b16 %v169
    %v687 = vunpack.c.l.b16 %v170
    %v688 = vunpack.c.h.b16 %v170
    %v689 = vunpack.c.l.b16 %v171
    %v690 = vunpack.c.h.b16 %v171
    %v691 = vunpack.c.l.b16 %v172
    %v692 = vunpack.c.h.b16 %v172
    %v693 = vunpack.c.l.b16 %v173
    %v694 = vunpack.c.h.b16 %v173
    %v695 = vunpack.c.l.b16 %v174
    %v696 = vunpack.c.h.b16 %v174
    %v697 = vunpack.c.l.b16 %v175
    %v698 = vunpack.c.h.b16 %v175
    %v699 = vunpack.c.l.b16 %v176
    %v700 = vunpack.c.h.b16 %v176
    %v701 = vunpack.c.l.b16 %v177
    %v702 = vunpack.c.h.b16 %v177
    %v703 = vunpack.c.l.b16 %v178
    %v704 = vunpack.c.h.b16 %v178
    %v705 = vunpack.c.l.b16 %v179
    %v706 = vunpack.c.h.b16 %v179
    %v707 = vunpack.c.l.b16 %v180
    %v708 = vunpack.c.h.b16 %v180
    %v709 = vunpack.c.l.b16 %v181
    %v710 = vunpack.c.h.b16 %v181
    %v711 = vunpack.c.l.b16 %v182
    %v712 = vunpack.c.h.b16 %v182
    %v713 = vunpack.c.l.b16 %v183
    %v714 = vunpack.c.h.b16 %v183
    %v715 = vunpack.c.l.b16 %v184
    %v716 = vunpack.c.h.b16 %v184
    %v717 = vunpack.c.l.b16 %v185
    %v718 = vunpack.c.h.b16 %v185
    %v719 = vunpack.c.l.b16 %v186
    %v720 = vunpack.c.h.b16 %v186
    %v721 = vunpack.c.l.b16 %v187
    %v722 = vunpack.c.h.b16 %v187
    %v723 = vunpack.c.l.b16 %v188
    %v724 = vunpack.c.h.b16 %v188
    %v725 = vunpack.c.l.b16 %v189
    %v726 = vunpack.c.h.b16 %v189
    %v727 = vunpack.c.l.b16 %v190
    %v728 = vunpack.c.h.b16 %v190
    %v729 = vunpack.c.l.b16 %v191
    %v730 = vunpack.c.h.b16 %v191
    %v731 = vunpack.c.l.b16 %v192
    %v732 = vunpack.c.h.b16 %v192
    %v733 = vunpack.c.l.b16 %v193
    %v734 = vunpack.c.h.b16 %v193
    %v735 = vunpack.c.l.b16 %v194
    %v736 = vunpack.c.h.b16 %v194
    %v737 = vunpack.c.l.b16 %v195
    %v738 = vunpack.c.h.b16 %v195
    %v739 = vunpack.c.l.b16 %v196
    %v740 = vunpack.c.h.b16 %v196
    %v741 = vunpack.c.l.b16 %v197
    %v742 = vunpack.c.h.b16 %v197
    %v743 = vunpack.c.l.b16 %v198
    %v744 = vunpack.c.h.b16 %v198
    %v745 = vunpack.c.l.b16 %v199
    %v746 = vunpack.c.h.b16 %v199
    %v747 = vunpack.c.l.b16 %v200
    %v748 = vunpack.c.h.b16 %v200
    %v749 = vunpack.c.l.b16 %v201
    %v750 = vunpack.c.h.b16 %v201
    %v751 = vunpack.c.l.b16 %v202
    %v752 = vunpack.c.h.b16 %v202
    %v753 = vunpack.c.l.b16 %v203
    %v754 = vunpack.c.h.b16 %v203
    %v755 = vunpack.c.l.b16 %v204
    %v756 = vunpack.c.h.b16 %v204
    %v757 = vunpack.c.l.b16 %v205
    %v758 = vunpack.c.h.b16 %v205
    %v759 = vunpack.c.l.b16 %v206
    %v760 = vunpack.c.h.b16 %v206
    %v761 = vunpack.c.l.b16 %v207
    %v762 = vunpack.c.h.b16 %v207
    %v763 = vunpack.c.l.b16 %v208
    %v764 = vunpack.c.h.b16 %v208
    %v765 = vunpack.c.l.b16 %v209
    %v766 = vunpack.c.h.b16 %v209
    %v767 = vunpack.c.l.b16 %v210
    %v768 = vunpack.c.h.b16 %v210
    %v769 = vunpack.c.l.b16 %v211
    %v770 = vunpack.c.h.b16 %v211
    %v771 = vunpack.c.l.b16 %v212
    %v772 = vunpack.c.h.b16 %v212
    %v773 = vunpack.c.l.b16 %v213
    %v774 = vunpack.c.h.b16 %v213
    %v775 = vunpack.c.l.b16 %v214
    %v776 = vunpack.c.h.b16 %v214
    %v777 = vunpack.c.l.b16 %v215
    %v778 = vunpack.c.h.b16 %v215
    %v779 = vunpack.c.l.b16 %v216
    %v780 = vunpack.c.h.b16 %v216
    %v781 = vunpack.c.l.b16 %v217
    %v782 = vunpack.c.h.b16 %v217
    %v783 = vunpack.c.l.b16 %v218
    %v784 = vunpack.c.h.b16 %v218
    %v785 = vunpack.c.l.b16 %v219
    %v786 = vunpack.c.h.b16 %v219
    %v787 = vunpack.c.l.b16 %v220
    %v788 = vunpack.c.h.b16 %v220
    %v789 = vunpack.c.l.b16 %v221
    %v790 = vunpack.c.h.b16 %v221
    %v791 = vunpack.c.l.b16 %v222
    %v792 = vunpack.c.h.b16 %v222
    %v793 = vunpack.c.l.b16 %v223
    %v794 = vunpack.c.h.b16 %v223
    %v795 = vunpack.c.l.b16 %v224
    %v796 = vunpack.c.h.b16 %v224
    %v797 = vunpack.c.l.b16 %v225
    %v798 = vunpack.c.h.b16 %v225
    %v799 = vunpack.c.l.b16 %v226
    %v800 = vunpack.c.h.b16 %v226
    %v801 = vunpack.c.l.b16 %v227
    %v802 = vunpack.c.h.b16 %v227
    %v803 = vunpack.c.l.b16 %v228
    %v804 = vunpack.c.h.b16 %v228
    %v805 = vunpack.c.l.b16 %v229
    %v806 = vunpack.c.h.b16 %v229
    %v807 = vunpack.c.l.b16 %v230
    %v808 = vunpack.c.h.b16 %v230
    %v809 = vunpack.c.l.b16 %v231
    %v810 = vunpack.c.h.b16 %v231
    %v811 = vunpack.c.l.b16 %v232
    %v812 = vunpack.c.h.b16 %v232
    %v813 = vunpack.c.l.b16 %v233
    %v814 = vunpack.c.h.b16 %v233
    %v815 = vunpack.c.l.b16 %v234
    %v816 = vunpack.c.h.b16 %v234
    %v817 = vunpack.c.l.b16 %v235
    %v818 = vunpack.c.h.b16 %v235
    %v819 = vunpack.c.l.b16 %v236
    %v820 = vunpack.c.h.b16 %v236
    %v821 = vunpack.c.l.b16 %v237
    %v822 = vunpack.c.h.b16 %v237
    %v823 = vunpack.c.l.b16 %v238
    %v824 = vunpack.c.h.b16 %v238
    %v825 = vunpack.c.l.b16 %v239
    %v826 = vunpack.c.h.b16 %v239
    %v827 = vunpack.c.l.b16 %v240
    %v828 = vunpack.c.h.b16 %v240
    %v829 = vunpack.c.l.b16 %v241
    %v830 = vunpack.c.h.b16 %v241
    %v831 = vunpack.c.l.b16 %v242
    %v832 = vunpack.c.h.b16 %v242
    %v833 = vunpack.c.l.b16 %v243
    %v834 = vunpack.c.h.b16 %v243
    %v835 = vunpack.c.l.b16 %v244
    %v836 = vunpack.c.h.b16 %v244
    %v837 = vunpack.c.l.b16 %v245
    %v838 = vunpack.c.h.b16 %v245
    %v839 = vunpack.c.l.b16 %v246
    %v840 = vunpack.c.h.b16 %v246
    %v841 = vunpack.c.l.b16 %v247
    %v842 = vunpack.c.h.b16 %v247
    %v843 = vunpack.c.l.b16 %v248
    %v844 = vunpack.c.h.b16 %v248
    %v845 = vunpack.c.l.b16 %v249
    %v846 = vunpack.c.h.b16 %v249
    %v847 = vunpack.c.l.b16 %v250
    %v848 = vunpack.c.h.b16 %v250
    %v849 = vunpack.c.l.b16 %v251
    %v850 = vunpack.c.h.b16 %v251
    %v851 = vunpack.c.l.b16 %v252
    %v852 = vunpack.c.h.b16 %v252
    %v853 = vunpack.c.l.b16 %v253
    %v854 = vunpack.c.h.b16 %v253
    %v855 = vunpack.c.l.b16 %v254
    %v856 = vunpack.c.h.b16 %v254
    %v857 = vunpack.c.l.b16 %v255
    %v858 = vunpack.c.h.b16 %v255
    %v859 = vunpack.c.l.b16 %v256
    %v860 = vunpack.c.h.b16 %v256
    %v861 = vunpack.c.l.b16 %v257
    %v862 = vunpack.c.h.b16 %v257
    %v863 = vunpack.c.l.b16 %v258
    %v864 = vunpack.c.h.b16 %v258
    %v865 = vunpack.c.l.b16 %v259
    %v866 = vunpack.c.h.b16 %v259
    %v867 = vunpack.c.l.b16 %v260
    %v868 = vunpack.c.h.b16 %v260
    %v869 = vunpack.c.l.b16 %v261
    %v870 = vunpack.c.h.b16 %v261
    %v871 = vunpack.c.l.b16 %v262
    %v872 = vunpack.c.h.b16 %v262
    %v873 = vunpack.c.l.b16 %v263
    %v874 = vunpack.c.h.b16 %v263
    %v875 = vunpack.c.l.b16 %v264
    %v876 = vunpack.c.h.b16 %v264
    %v877 = vunpack.c.l.b16 %v265
    %v878 = vunpack.c.h.b16 %v265
    %v879 = vunpack.c.l.b16 %v266
    %v880 = vunpack.c.h.b16 %v266
    %v881 = vunpack.c.l.b16 %v267
    %v882 = vunpack.c.h.b16 %v267
    %v883 = vunpack.c.l.b16 %v268
    %v884 = vunpack.c.h.b16 %v268
    %v885 = vunpack.c.l.b16 %v269
    %v886 = vunpack.c.h.b16 %v269
    %v887 = vunpack.c.l.b16 %v270
    %v888 = vunpack.c.h.b16 %v270
    %v889 = vunpack.c.l.b16 %v271
    %v890 = vunpack.c.h.b16 %v271
    %v891 = vunpack.c.l.b16 %v272
    %v892 = vunpack.c.h.b16 %v272
    %v893 = vunpack.c.l.b16 %v273
    %v894 = vunpack.c.h.b16 %v273
    %v895 = vunpack.c.l.b16 %v274
    %v896 = vunpack.c.h.b16 %v274
    %v897 = vunpack.c.l.b16 %v275
    %v898 = vunpack.c.h.b16 %v275
    %v899 = vunpack.c.l.b16 %v276
    %v900 = vunpack.c.h.b16 %v276
    %v901 = vunpack.c.l.b16 %v277
    %v902 = vunpack.c.h.b16 %v277
    %v903 = vunpack.c.l.b16 %v278
    %v904 = vunpack.c.h.b16 %v278
    %v905 = vunpack.c.l.b16 %v279
    %v906 = vunpack.c.h.b16 %v279
    %v907 = vunpack.c.l.b16 %v280
    %v908 = vunpack.c.h.b16 %v280
    %v909 = vunpack.c.l.b16 %v281
    %v910 = vunpack.c.h.b16 %v281
    %v911 = vunpack.c.l.b16 %v282
    %v912 = vunpack.c.h.b16 %v282
    %v913 = vunpack.c.l.b16 %v283
    %v914 = vunpack.c.h.b16 %v283
    %v915 = vunpack.c.l.b16 %v284
    %v916 = vunpack.c.h.b16 %v284
    %v917 = vunpack.c.l.b16 %v285
    %v918 = vunpack.c.h.b16 %v285
    %v919 = vunpack.c.l.b16 %v286
    %v920 = vunpack.c.h.b16 %v286
    %v921 = vpack.c.b16 %v533, %v529
    %v922 = vpack.c.b16 %v534, %v530
    %v923 = vpack.c.b16 %v535, %v531
    %v924 = vpack.c.b16 %v536, %v532
    %v925 = vpack.c.b16 %v541, %v537
    %v926 = vpack.c.b16 %v542, %v538
    %v927 = vpack.c.b16 %v543, %v539
    %v928 = vpack.c.b16 %v544, %v540
    %v929 = vpack.c.b16 %v549, %v545
    %v930 = vpack.c.b16 %v550, %v546
    %v931 = vpack.c.b16 %v551, %v547
    %v932 = vpack.c.b16 %v552, %v548
    %v933 = vpack.c.b16 %v557, %v553
    %v934 = vpack.c.b16 %v558, %v554
    %v935 = vpack.c.b16 %v559, %v555
    %v936 = vpack.c.b16 %v560, %v556
    %v937 = vpack.c.b16 %v565, %v561
    %v938 = vpack.c.b16 %v566, %v562
    %v939 = vpack.c.b16 %v567, %v563
    %v940 = vpack.c.b16 %v568, %v564
    %v941 = vpack.c.b16 %v573, %v569
    %v942 = vpack.c.b16 %v574, %v570
    %v943 = vpack.c.b16 %v575, %v571
    %v944 = vpack.c.b16 %v576, %v572
    %v945 = vpack.c.b16 %v581, %v577
    %v946 = vpack.c.b16 %v582, %v578
    %v947 = vpack.c.b16 %v583, %v579
    %v948 = vpack.c.b16 %v584, %v580
    %v949 = vpack.c.b16 %v589, %v585
    %v950 = vpack.c.b16 %v590, %v586
    %v951 = vpack.c.b16 %v591, %v587
    %v952 = vpack.c.b16 %v592, %v588
    %v953 = vpack.c.b16 %v597, %v593
    %v954 = vpack.c.b16 %v598, %v594
    %v955 = vpack.c.b16 %v599, %v595
    %v956 = vpack.c.b16 %v600, %v596
    %v957 = vpack.c.b16 %v605, %v601
    %v958 = vpack.c.b16 %v606, %v602
    %v959 = vpack.c.b16 %v607, %v603
    %v960 = vpack.c.b16 %v608, %v604
    %v961 = vpack.c.b16 %v613, %v609
    %v962 = vpack.c.b16 %v614, %v610
    %v963 = vpack.c.b16 %v615, %v611
    %v964 = vpack.c.b16 %v616, %v612
    %v965 = vpack.c.b16 %v621, %v617
    %v966 = vpack.c.b16 %v622, %v618
    %v967 = vpack.c.b16 %v623, %v619
    %v968 = vpack.c.b16 %v624, %v620
    %v969 = vpack.c.b16 %v629, %v625
    %v970 = vpack.c.b16 %v630, %v626
    %v971 = vpack.c.b16 %v631, %v627
    %v972 = vpack.c.b16 %v632, %v628
    %v973 = vpack.c.b16 %v637, %v633
    %v974 = vpack.c.b16 %v638, %v634
    %v975 = vpack.c.b16 %v639, %v635
    %v976 = vpack.c.b16 %v640, %v636
    %v977 = vpack.c.b16 %v645, %v641
    %v978 = vpack.c.b16 %v646, %v642
    %v979 = vpack.c.b16 %v647, %v643
    %v980 = vpack.c.b16 %v648, %v644
    %v981 = vpack.c.b16 %v653, %v649
    %v982 = vpack.c.b16 %v654, %v650
    %v983 = vpack.c.b16 %v655, %v651
    %v984 = vpack.c.b16 %v656, %v652
    %v985 = vpack.c.b16 %v661, %v657
    %v986 = vpack.c.b16 %v662, %v658
    %v987 = vpack.c.b16 %v663, %v659
    %v988 = vpack.c.b16 %v664, %v660
    %v989 = vpack.c.b16 %v669, %v665
    %v990 = vpack.c.b16 %v670, %v666
    %v991 = vpack.c.b16 %v671, %v667
    %v992 = vpack.c.b16 %v672, %v668
    %v993 = vpack.c.b16 %v677, %v673
    %v994 = vpack.c.b16 %v678, %v674
    %v995 = vpack.c.b16 %v679, %v675
    %v996 = vpack.c.b16 %v680, %v676
    %v997 = vpack.c.b16 %v685, %v681
    %v998 = vpack.c.b16 %v686, %v682
    %v999 = vpack.c.b16 %v687, %v683
    %v1000 = vpack.c.b16 %v688, %v684
    %v1001 = vpack.c.b16 %v693, %v689
    %v1002 = vpack.c.b16 %v694, %v690
    %v1003 = vpack.c.b16 %v695, %v691
    %v1004 = vpack.c.b16 %v696, %v692
    %v1005 = vpack.c.b16 %v701, %v697
    %v1006 = vpack.c.b16 %v702, %v698
    %v1007 = vpack.c.b16 %v703, %v699
    %v1008 = vpack.c.b16 %v704, %v700
    %v1009 = vpack.c.b16 %v709, %v705
    %v1010 = vpack.c.b16 %v710, %v706
    %v1011 = vpack.c.b16 %v711, %v707
    %v1012 = vpack.c.b16 %v712, %v708
    %v1013 = vpack.c.b16 %v717, %v713
    %v1014 = vpack.c.b16 %v718, %v714
    %v1015 = vpack.c.b16 %v719, %v715
    %v1016 = vpack.c.b16 %v720, %v716
    %v1017 = vpack.c.b16 %v725, %v721
    %v1018 = vpack.c.b16 %v726, %v722
    %v1019 = vpack.c.b16 %v727, %v723
    %v1020 = vpack.c.b16 %v728, %v724
    %v1021 = vpack.c.b16 %v733, %v729
    %v1022 = vpack.c.b16 %v734, %v730
    %v1023 = vpack.c.b16 %v735, %v731
    %v1024 = vpack.c.b16 %v736, %v732
    %v1025 = vpack.c.b16 %v741, %v737
    %v1026 = vpack.c.b16 %v742, %v738
    %v1027 = vpack.c.b16 %v743, %v739
    %v1028 = vpack.c.b16 %v744, %v740
    %v1029 = vpack.c.b16 %v749, %v745
    %v1030 = vpack.c.b16 %v750, %v746
    %v1031 = vpack.c.b16 %v751, %v747
    %v1032 = vpack.c.b16 %v752, %v748
    %v1033 = vpack.c.b16 %v757, %v753
    %v1034 = vpack.c.b16 %v758, %v754
    %v1035 = vpack.c.b16 %v759, %v755
    %v1036 = vpack.c.b16 %v760, %v756
    %v1037 = vpack.c.b16 %v765, %v761
    %v1038 = vpack.c.b16 %v766, %v762
    %v1039 = vpack.c.b16 %v767, %v763
    %v1040 = vpack.c.b16 %v768, %v764
    %v1041 = vpack.c.b16 %v773, %v769
    %v1042 = vpack.c.b16 %v774, %v770
    %v1043 = vpack.c.b16 %v775, %v771
    %v1044 = vpack.c.b16 %v776, %v772
    %v1045 = vpack.c.b16 %v781, %v777
    %v1046 = vpack.c.b16 %v782, %v778
    %v1047 = vpack.c.b16 %v783, %v779
    %v1048 = vpack.c.b16 %v784, %v780
    %v1049 = vpack.c.b16 %v789, %v785
    %v1050 = vpack.c.b16 %v790, %v786
    %v1051 = vpack.c.b16 %v791, %v787
    %v1052 = vpack.c.b16 %v792, %v788
    %v1053 = vpack.c.b16 %v797, %v793
    %v1054 = vpack.c.b16 %v798, %v794
    %v1055 = vpack.c.b16 %v799, %v795
    %v1056 = vpack.c.b16 %v800, %v796
    %v1057 = vpack.c.b16 %v805, %v801
    %v1058 = vpack.c.b16 %v806, %v802
    %v1059 = vpack.c.b16 %v807, %v803
    %v1060 = vpack.c.b16 %v808, %v804
    %v1061 = vpack.c.b16 %v813, %v809
    %v1062 = vpack.c.b16 %v814, %v810
    %v1063 = vpack.c.b16 %v815, %v811
    %v1064 = vpack.c.b16 %v816, %v812
    %v1065 = vpack.c.b16 %v821, %v817
    %v1066 = vpack.c.b16 %v822, %v818
    %v1067 = vpack.c.b16 %v823, %v819
    %v1068 = vpack.c.b16 %v824, %v820
    %v1069 = vpack.c.b16 %v829, %v825
    %v1070 = vpack.c.b16 %v830, %v826
    %v1071 = vpack.c.b16 %v831, %v827
    %v1072 = vpack.c.b16 %v832, %v828
    %v1073 = vpack.c.b16 %v837, %v833
    %v1074 = vpack.c.b16 %v838, %v834
    %v1075 = vpack.c.b16 %v839, %v835
    %v1076 = vpack.c.b16 %v840, %v836
    %v1077 = vpack.c.b16 %v845, %v841
    %v1078 = vpack.c.b16 %v846, %v842
    %v1079 = vpack.c.b16 %v847, %v843
    %v1080 = vpack.c.b16 %v848, %v844
    %v1081 = vpack.c.b16 %v853, %v849
    %v1082 = vpack.c.b16 %v854, %v850
    %v1083 = vpack.c.b16 %v855, %v851
    %v1084 = vpack.c.b16 %v856, %v852
    %v1085 = vpack.c.b16 %v861, %v857
    %v1086 = vpack.c.b16 %v862, %v858
    %v1087 = vpack.c.b16 %v863, %v859
    %v1088 = vpack.c.b16 %v864, %v860
    %v1089 = vpack.c.b16 %v869, %v865
    %v1090 = vpack.c.b16 %v870, %v866
    %v1091 = vpack.c.b16 %v871, %v867
    %v1092 = vpack.c.b16 %v872, %v868
    %v1093 = vpack.c.b16 %v877, %v873
    %v1094 = vpack.c.b16 %v878, %v874
    %v1095 = vpack.c.b16 %v879, %v875
    %v1096 = vpack.c.b16 %v880, %v876
    %v1097 = vpack.c.b16 %v885, %v881
    %v1098 = vpack.c.b16 %v886, %v882
    %v1099 = vpack.c.b16 %v887, %v883
    %v1100 = vpack.c.b16 %v888, %v884
    %v1101 = vpack.c.b16 %v893, %v889
    %v1102 = vpack.c.b16 %v894, %v890
    %v1103 = vpack.c.b16 %v895, %v891
    %v1104 = vpack.c.b16 %v896, %v892
    %v1105 = vpack.c.b16 %v901, %v897
    %v1106 = vpack.c.b16 %v902, %v898
    %v1107 = vpack.c.b16 %v903, %v899
    %v1108 = vpack.c.b16 %v904, %v900
    %v1109 = vpack.c.b16 %v909, %v905
    %v1110 = vpack.c.b16 %v910, %v906
    %v1111 = vpack.c.b16 %v911, %v907
    %v1112 = vpack.c.b16 %v912, %v908
    %v1113 = vpack.c.b16 %v917, %v913
    %v1114 = vpack.c.b16 %v918, %v914
    %v1115 = vpack.c.b16 %v919, %v915
    %v1116 = vpack.c.b16 %v920, %v916
    %vm1313 = vcmask 130048
    %v1315 = vsel %vm1313, %v326, 0
    %1317 = vmatprep.subr.bf16.mxu0 %v922
    %1318 = vmatpush1.bf16.msra.mxu0 %v921
    %1319 = vmatprep.subr.bf16.mxu0 %v926
    %1320 = vmatpush1.bf16.msra.mxu0 %v925
    %1321 = vmatprep.subr.bf16.mxu0 %v930
    %1322 = vmatpush1.bf16.msra.mxu0 %v929
    %1323 = vmatprep.subr.bf16.mxu0 %v934
    %1324 = vmatpush1.bf16.msra.mxu0 %v933
    %1325 = vmatprep.subr.bf16.mxu0 %v938
    %1326 = vmatpush1.bf16.msra.mxu0 %v937
    %1327 = vmatprep.subr.bf16.mxu0 %v942
    %1328 = vmatpush1.bf16.msra.mxu0 %v941
    %1329 = vmatprep.subr.bf16.mxu0 %v946
    %1330 = vmatpush1.bf16.msra.mxu0 %v945
    %1331 = vmatprep.subr.bf16.mxu0 %v950
    %1332 = vmatpush1.bf16.msra.mxu0 %v949
    %1333 = vmatprep.subr.bf16.mxu0 %v954
    %1334 = vmatpush1.bf16.msra.mxu0 %v953
    %1335 = vmatprep.subr.bf16.mxu0 %v958
    %1336 = vmatpush1.bf16.msra.mxu0 %v957
    %1337 = vmatprep.subr.bf16.mxu0 %v962
    %1338 = vmatpush1.bf16.msra.mxu0 %v961
    %1339 = vmatprep.subr.bf16.mxu0 %v966
    %1340 = vmatpush1.bf16.msra.mxu0 %v965
    %1341 = vmatprep.subr.bf16.mxu0 %v970
    %1342 = vmatpush1.bf16.msra.mxu0 %v969
    %1343 = vmatprep.subr.bf16.mxu0 %v974
    %1344 = vmatpush1.bf16.msra.mxu0 %v973
    %1345 = vmatprep.subr.bf16.mxu0 %v978
    %1346 = vmatpush1.bf16.msra.mxu0 %v977
    %1347 = vmatprep.subr.bf16.mxu0 %v982
    %1348 = vmatpush1.bf16.msra.mxu0 %v981
    %1349 = vmatprep.mubr.bf16.mxu0 %v321
    %1350 = vmatmul.mubr.bf16.gmra.mrb[0].mxu0 %v320
    %v1351 = vpop.f32.mrb[0].mxu0
    %v1352 = vadd.f32 %v292, %v1351
    %v1353 = vpop.f32.mrb[0].mxu0
    %v1354 = vadd.f32 %v296, %v1353
    %v1355 = vpop.f32.mrb[0].mxu0
    %v1356 = vpop.f32.mrb[0].mxu0
    %1357 = vdwg.mxu0
    %1358 = vmatprep.subr.bf16.mxu0 %v986
    %1359 = vmatpush1.bf16.msra.mxu0 %v985
    %1360 = vmatprep.subr.bf16.mxu0 %v990
    %1361 = vmatpush1.bf16.msra.mxu0 %v989
    %1362 = vmatprep.subr.bf16.mxu0 %v994
    %1363 = vmatpush1.bf16.msra.mxu0 %v993
    %1364 = vmatprep.subr.bf16.mxu0 %v998
    %1365 = vmatpush1.bf16.msra.mxu0 %v997
    %1366 = vmatprep.subr.bf16.mxu0 %v1002
    %1367 = vmatpush1.bf16.msra.mxu0 %v1001
    %1368 = vmatprep.subr.bf16.mxu0 %v1006
    %1369 = vmatpush1.bf16.msra.mxu0 %v1005
    %1370 = vmatprep.subr.bf16.mxu0 %v1010
    %1371 = vmatpush1.bf16.msra.mxu0 %v1009
    %1372 = vmatprep.subr.bf16.mxu0 %v1014
    %1373 = vmatpush1.bf16.msra.mxu0 %v1013
    %1374 = vmatprep.subr.bf16.mxu0 %v1018
    %1375 = vmatpush1.bf16.msra.mxu0 %v1017
    %1376 = vmatprep.subr.bf16.mxu0 %v1022
    %1377 = vmatpush1.bf16.msra.mxu0 %v1021
    %1378 = vmatprep.subr.bf16.mxu0 %v1026
    %1379 = vmatpush1.bf16.msra.mxu0 %v1025
    %1380 = vmatprep.subr.bf16.mxu0 %v1030
    %1381 = vmatpush1.bf16.msra.mxu0 %v1029
    %1382 = vmatprep.subr.bf16.mxu0 %v1034
    %1383 = vmatpush1.bf16.msra.mxu0 %v1033
    %1384 = vmatprep.subr.bf16.mxu0 %v1038
    %1385 = vmatpush1.bf16.msra.mxu0 %v1037
    %1386 = vmatprep.subr.bf16.mxu0 %v1042
    %1387 = vmatpush1.bf16.msra.mxu0 %v1041
    %1388 = vmatprep.subr.bf16.mxu0 %v1046
    %1389 = vmatpush1.bf16.msra.mxu0 %v1045
    %1390 = vmatprep.mubr.bf16.mxu0 %v323
    %1391 = vmatmul.mubr.bf16.gmra.mrb[0].mxu0 %v322
    %v1392 = vpop.f32.mrb[0].mxu0
    %v1393 = vadd.f32 %v1352, %v1392
    %v1394 = vpop.f32.mrb[0].mxu0
    %v1395 = vadd.f32 %v1354, %v1394
    %v1396 = vpop.f32.mrb[0].mxu0
    %v1397 = vpop.f32.mrb[0].mxu0
    %1398 = vdwg.mxu0
    %1399 = vmatprep.subr.bf16.mxu0 %v1050
    %1400 = vmatpush1.bf16.msra.mxu0 %v1049
    %1401 = vmatprep.subr.bf16.mxu0 %v1054
    %1402 = vmatpush1.bf16.msra.mxu0 %v1053
    %1403 = vmatprep.subr.bf16.mxu0 %v1058
    %1404 = vmatpush1.bf16.msra.mxu0 %v1057
    %1405 = vmatprep.subr.bf16.mxu0 %v1062
    %1406 = vmatpush1.bf16.msra.mxu0 %v1061
    %1407 = vmatprep.subr.bf16.mxu0 %v1066
    %1408 = vmatpush1.bf16.msra.mxu0 %v1065
    %1409 = vmatprep.subr.bf16.mxu0 %v1070
    %1410 = vmatpush1.bf16.msra.mxu0 %v1069
    %1411 = vmatprep.subr.bf16.mxu0 %v1074
    %1412 = vmatpush1.bf16.msra.mxu0 %v1073
    %1413 = vmatprep.subr.bf16.mxu0 %v1078
    %1414 = vmatpush1.bf16.msra.mxu0 %v1077
    %1415 = vmatprep.subr.bf16.mxu0 %v1082
    %1416 = vmatpush1.bf16.msra.mxu0 %v1081
    %1417 = vmatprep.subr.bf16.mxu0 %v1086
    %1418 = vmatpush1.bf16.msra.mxu0 %v1085
    %1419 = vmatprep.subr.bf16.mxu0 %v1090
    %1420 = vmatpush1.bf16.msra.mxu0 %v1089
    %1421 = vmatprep.subr.bf16.mxu0 %v1094
    %1422 = vmatpush1.bf16.msra.mxu0 %v1093
    %1423 = vmatprep.subr.bf16.mxu0 %v1098
    %1424 = vmatpush1.bf16.msra.mxu0 %v1097
    %1425 = vmatprep.subr.bf16.mxu0 %v1102
    %1426 = vmatpush1.bf16.msra.mxu0 %v1101
    %1427 = vmatprep.subr.bf16.mxu0 %v1106
    %1428 = vmatpush1.bf16.msra.mxu0 %v1105
    %1429 = vmatprep.subr.bf16.mxu0 %v1110
    %1430 = vmatpush1.bf16.msra.mxu0 %v1109
    %1431 = vmatprep.mubr.bf16.mxu0 %v325
    %1432 = vmatmul.mubr.bf16.gmra.mrb[0].mxu0 %v324
    %v1433 = vpop.f32.mrb[0].mxu0
    %v1434 = vadd.f32 %v1393, %v1433
    %v1435 = vpop.f32.mrb[0].mxu0
    %v1436 = vadd.f32 %v1395, %v1435
    %v1437 = vpop.f32.mrb[0].mxu0
    %v1438 = vpop.f32.mrb[0].mxu0
    %1439 = vdwg.mxu0
    %1440 = vmatprep.subr.bf16.mxu0 %v1114
    %1441 = vmatpush1.bf16.msra.mxu0 %v1113
    %1442 = vmatprep.subr.bf16.mxu0 0
    %1443 = vmatpush1.bf16.msra.mxu0 0
    %1444 = vmatprep.subr.bf16.mxu0 0
    %1445 = vmatpush1.bf16.msra.mxu0 0
    %1446 = vmatprep.subr.bf16.mxu0 0
    %1447 = vmatpush1.bf16.msra.mxu0 0
    %1448 = vmatprep.subr.bf16.mxu0 0
    %1449 = vmatpush1.bf16.msra.mxu0 0
    %1450 = vmatprep.subr.bf16.mxu0 0
    %1451 = vmatpush1.bf16.msra.mxu0 0
    %1452 = vmatprep.subr.bf16.mxu0 0
    %1453 = vmatpush1.bf16.msra.mxu0 0
    %1454 = vmatprep.subr.bf16.mxu0 0
    %1455 = vmatpush1.bf16.msra.mxu0 0
    %1456 = vmatprep.subr.bf16.mxu0 0
    %1457 = vmatpush1.bf16.msra.mxu0 0
    %1458 = vmatprep.subr.bf16.mxu0 0
    %1459 = vmatpush1.bf16.msra.mxu0 0
    %1460 = vmatprep.subr.bf16.mxu0 0
    %1461 = vmatpush1.bf16.msra.mxu0 0
    %1462 = vmatprep.subr.bf16.mxu0 0
    %1463 = vmatpush1.bf16.msra.mxu0 0
    %1464 = vmatprep.subr.bf16.mxu0 0
    %1465 = vmatpush1.bf16.msra.mxu0 0
    %1466 = vmatprep.subr.bf16.mxu0 0
    %1467 = vmatpush1.bf16.msra.mxu0 0
    %1468 = vmatprep.subr.bf16.mxu0 0
    %1469 = vmatpush1.bf16.msra.mxu0 0
    %1470 = vmatprep.subr.bf16.mxu0 0
    %1471 = vmatpush1.bf16.msra.mxu0 0
    %1472 = vmatprep.mubr.bf16.mxu0 0
    %1473 = vmatmul.mubr.bf16.gmra.mrb[0].mxu0 %v1315
    %v1474 = vpop.f32.mrb[0].mxu0
    %v1475 = vadd.f32 %v1434, %v1474
    %v1476 = vpop.f32.mrb[0].mxu0
    %v1477 = vadd.f32 %v1436, %v1476
    %v1478 = vpop.f32.mrb[0].mxu0
    %v1479 = vpop.f32.mrb[0].mxu0
    %1480 = vdwg.mxu0
    %1481 = vmatprep.subr.bf16.mxu0 %v924
    %1482 = vmatpush1.bf16.msra.mxu0 %v923
    %1483 = vmatprep.subr.bf16.mxu0 %v928
    %1484 = vmatpush1.bf16.msra.mxu0 %v927
    %1485 = vmatprep.subr.bf16.mxu0 %v932
    %1486 = vmatpush1.bf16.msra.mxu0 %v931
    %1487 = vmatprep.subr.bf16.mxu0 %v936
    %1488 = vmatpush1.bf16.msra.mxu0 %v935
    %1489 = vmatprep.subr.bf16.mxu0 %v940
    %1490 = vmatpush1.bf16.msra.mxu0 %v939
    %1491 = vmatprep.subr.bf16.mxu0 %v944
    %1492 = vmatpush1.bf16.msra.mxu0 %v943
    %1493 = vmatprep.subr.bf16.mxu0 %v948
    %1494 = vmatpush1.bf16.msra.mxu0 %v947
    %1495 = vmatprep.subr.bf16.mxu0 %v952
    %1496 = vmatpush1.bf16.msra.mxu0 %v951
    %1497 = vmatprep.subr.bf16.mxu0 %v956
    %1498 = vmatpush1.bf16.msra.mxu0 %v955
    %1499 = vmatprep.subr.bf16.mxu0 %v960
    %1500 = vmatpush1.bf16.msra.mxu0 %v959
    %1501 = vmatprep.subr.bf16.mxu0 %v964
    %1502 = vmatpush1.bf16.msra.mxu0 %v963
    %1503 = vmatprep.subr.bf16.mxu0 %v968
    %1504 = vmatpush1.bf16.msra.mxu0 %v967
    %1505 = vmatprep.subr.bf16.mxu0 %v972
    %1506 = vmatpush1.bf16.msra.mxu0 %v971
    %1507 = vmatprep.subr.bf16.mxu0 %v976
    %1508 = vmatpush1.bf16.msra.mxu0 %v975
    %1509 = vmatprep.subr.bf16.mxu0 %v980
    %1510 = vmatpush1.bf16.msra.mxu0 %v979
    %1511 = vmatprep.subr.bf16.mxu0 %v984
    %1512 = vmatpush1.bf16.msra.mxu0 %v983
    %1513 = vmatprep.mubr.bf16.mxu0 %v321
    %1514 = vmatmul.mubr.bf16.gmra.mrb[0].mxu0 %v320
    %v1515 = vpop.f32.mrb[0].mxu0
    %v1516 = vadd.f32 %v300, %v1515
    %v1517 = vpop.f32.mrb[0].mxu0
    %v1518 = vadd.f32 %v304, %v1517
    %v1519 = vpop.f32.mrb[0].mxu0
    %v1520 = vpop.f32.mrb[0].mxu0
    %1521 = vdwg.mxu0
    %1522 = vmatprep.subr.bf16.mxu0 %v988
    %1523 = vmatpush1.bf16.msra.mxu0 %v987
    %1524 = vmatprep.subr.bf16.mxu0 %v992
    %1525 = vmatpush1.bf16.msra.mxu0 %v991
    %1526 = vmatprep.subr.bf16.mxu0 %v996
    %1527 = vmatpush1.bf16.msra.mxu0 %v995
    %1528 = vmatprep.subr.bf16.mxu0 %v1000
    %1529 = vmatpush1.bf16.msra.mxu0 %v999
    %1530 = vmatprep.subr.bf16.mxu0 %v1004
    %1531 = vmatpush1.bf16.msra.mxu0 %v1003
    %1532 = vmatprep.subr.bf16.mxu0 %v1008
    %1533 = vmatpush1.bf16.msra.mxu0 %v1007
    %1534 = vmatprep.subr.bf16.mxu0 %v1012
    %1535 = vmatpush1.bf16.msra.mxu0 %v1011
    %1536 = vmatprep.subr.bf16.mxu0 %v1016
    %1537 = vmatpush1.bf16.msra.mxu0 %v1015
    %1538 = vmatprep.subr.bf16.mxu0 %v1020
    %1539 = vmatpush1.bf16.msra.mxu0 %v1019
    %1540 = vmatprep.subr.bf16.mxu0 %v1024
    %1541 = vmatpush1.bf16.msra.mxu0 %v1023
    %1542 = vmatprep.subr.bf16.mxu0 %v1028
    %1543 = vmatpush1.bf16.msra.mxu0 %v1027
    %1544 = vmatprep.subr.bf16.mxu0 %v1032
    %1545 = vmatpush1.bf16.msra.mxu0 %v1031
    %1546 = vmatprep.subr.bf16.mxu0 %v1036
    %1547 = vmatpush1.bf16.msra.mxu0 %v1035
    %1548 = vmatprep.subr.bf16.mxu0 %v1040
    %1549 = vmatpush1.bf16.msra.mxu0 %v1039
    %1550 = vmatprep.subr.bf16.mxu0 %v1044
    %1551 = vmatpush1.bf16.msra.mxu0 %v1043
    %1552 = vmatprep.subr.bf16.mxu0 %v1048
    %1553 = vmatpush1.bf16.msra.mxu0 %v1047
    %1554 = vmatprep.mubr.bf16.mxu0 %v323
    %1555 = vmatmul.mubr.bf16.gmra.mrb[0].mxu0 %v322
    %v1556 = vpop.f32.mrb[0].mxu0
    %v1557 = vadd.f32 %v1516, %v1556
    %v1558 = vpop.f32.mrb[0].mxu0
    %v1559 = vadd.f32 %v1518, %v1558
    %v1560 = vpop.f32.mrb[0].mxu0
    %v1561 = vpop.f32.mrb[0].mxu0
    %1562 = vdwg.mxu0
    %1563 = vmatprep.subr.bf16.mxu0 %v1052
    %1564 = vmatpush1.bf16.msra.mxu0 %v1051
    %1565 = vmatprep.subr.bf16.mxu0 %v1056
    %1566 = vmatpush1.bf16.msra.mxu0 %v1055
    %1567 = vmatprep.subr.bf16.mxu0 %v1060
    %1568 = vmatpush1.bf16.msra.mxu0 %v1059
    %1569 = vmatprep.subr.bf16.mxu0 %v1064
    %1570 = vmatpush1.bf16.msra.mxu0 %v1063
    %1571 = vmatprep.subr.bf16.mxu0 %v1068
    %1572 = vmatpush1.bf16.msra.mxu0 %v1067
    %1573 = vmatprep.subr.bf16.mxu0 %v1072
    %1574 = vmatpush1.bf16.msra.mxu0 %v1071
    %1575 = vmatprep.subr.bf16.mxu0 %v1076
    %1576 = vmatpush1.bf16.msra.mxu0 %v1075
    %1577 = vmatprep.subr.bf16.mxu0 %v1080
    %1578 = vmatpush1.bf16.msra.mxu0 %v1079
    %1579 = vmatprep.subr.bf16.mxu0 %v1084
    %1580 = vmatpush1.bf16.msra.mxu0 %v1083
    %1581 = vmatprep.subr.bf16.mxu0 %v1088
    %1582 = vmatpush1.bf16.msra.mxu0 %v1087
    %1583 = vmatprep.subr.bf16.mxu0 %v1092
    %1584 = vmatpush1.bf16.msra.mxu0 %v1091
    %1585 = vmatprep.subr.bf16.mxu0 %v1096
    %1586 = vmatpush1.bf16.msra.mxu0 %v1095
    %1587 = vmatprep.subr.bf16.mxu0 %v1100
    %1588 = vmatpush1.bf16.msra.mxu0 %v1099
    %1589 = vmatprep.subr.bf16.mxu0 %v1104
    %1590 = vmatpush1.bf16.msra.mxu0 %v1103
    %1591 = vmatprep.subr.bf16.mxu0 %v1108
    %1592 = vmatpush1.bf16.msra.mxu0 %v1107
    %1593 = vmatprep.subr.bf16.mxu0 %v1112
    %1594 = vmatpush1.bf16.msra.mxu0 %v1111
    %1595 = vmatprep.mubr.bf16.mxu0 %v325
    %1596 = vmatmul.mubr.bf16.gmra.mrb[0].mxu0 %v324
    %v1597 = vpop.f32.mrb[0].mxu0
    %v1598 = vadd.f32 %v1557, %v1597
    %v1599 = vpop.f32.mrb[0].mxu0
    %v1600 = vadd.f32 %v1559, %v1599
    %v1601 = vpop.f32.mrb[0].mxu0
    %v1602 = vpop.f32.mrb[0].mxu0
    %1603 = vdwg.mxu0
    %1604 = vmatprep.subr.bf16.mxu0 %v1116
    %1605 = vmatpush1.bf16.msra.mxu0 %v1115
    %1606 = vmatprep.subr.bf16.mxu0 0
    %1607 = vmatpush1.bf16.msra.mxu0 0
    %1608 = vmatprep.subr.bf16.mxu0 0
    %1609 = vmatpush1.bf16.msra.mxu0 0
    %1610 = vmatprep.subr.bf16.mxu0 0
    %1611 = vmatpush1.bf16.msra.mxu0 0
    %1612 = vmatprep.subr.bf16.mxu0 0
    %1613 = vmatpush1.bf16.msra.mxu0 0
    %1614 = vmatprep.subr.bf16.mxu0 0
    %1615 = vmatpush1.bf16.msra.mxu0 0
    %1616 = vmatprep.subr.bf16.mxu0 0
    %1617 = vmatpush1.bf16.msra.mxu0 0
    %1618 = vmatprep.subr.bf16.mxu0 0
    %1619 = vmatpush1.bf16.msra.mxu0 0
    %1620 = vmatprep.subr.bf16.mxu0 0
    %1621 = vmatpush1.bf16.msra.mxu0 0
    %1622 = vmatprep.subr.bf16.mxu0 0
    %1623 = vmatpush1.bf16.msra.mxu0 0
    %1624 = vmatprep.subr.bf16.mxu0 0
    %1625 = vmatpush1.bf16.msra.mxu0 0
    %1626 = vmatprep.subr.bf16.mxu0 0
    %1627 = vmatpush1.bf16.msra.mxu0 0
    %1628 = vmatprep.subr.bf16.mxu0 0
    %1629 = vmatpush1.bf16.msra.mxu0 0
    %1630 = vmatprep.subr.bf16.mxu0 0
    %1631 = vmatpush1.bf16.msra.mxu0 0
    %1632 = vmatprep.subr.bf16.mxu0 0
    %1633 = vmatpush1.bf16.msra.mxu0 0
    %1634 = vmatprep.subr.bf16.mxu0 0
    %1635 = vmatpush1.bf16.msra.mxu0 0
    %1636 = vmatprep.mubr.bf16.mxu0 0
    %1637 = vmatmul.mubr.bf16.gmra.mrb[0].mxu0 %v1315
    %v1638 = vpop.f32.mrb[0].mxu0
    %v1639 = vadd.f32 %v1598, %v1638
    %v1640 = vpop.f32.mrb[0].mxu0
    %v1641 = vadd.f32 %v1600, %v1640
    %v1642 = vpop.f32.mrb[0].mxu0
    %v1643 = vpop.f32.mrb[0].mxu0
    %1644 = vdwg.mxu0
    %v1645 = vmax.f32 %v1475, 0.0
    %v1646 = vmax.f32 %v1477, 0.0
    %v1647 = vmax.f32 %v1639, 0.0
    %v1648 = vmax.f32 %v1641, 0.0
    %v1649 = vpack.c.bf16 %v1645, %v1645
    %v1650 = vpack.c.bf16 %v1646, %v1646
    %v1651 = vpack.c.bf16 %v1647, %v1647
    %v1652 = vpack.c.bf16 %v1648, %v1648
    %v1653 = vld [vmem:[#allocation7] sm:$0xf]
    %v1654 = vld [vmem:[#allocation7 + $0x4] sm:$0xf]
    %v1655 = vld [vmem:[#allocation7 + $0x8] sm:$0xf]
    %v1656 = vld [vmem:[#allocation7 + $0xc] sm:$0xf]
    %v1657 = vld [vmem:[#allocation7 + $0x10] sm:$0xf]
    %v1658 = vld [vmem:[#allocation7 + $0x14] sm:$0xf]
    %v1659 = vld [vmem:[#allocation7 + $0x18] sm:$0xf]
    %v1660 = vld [vmem:[#allocation7 + $0x1c] sm:$0xf]
    %v1661 = vld [vmem:[#allocation7 + $0x20] sm:$0xf]
    %v1662 = vld [vmem:[#allocation7 + $0x24] sm:$0xf]
    %v1663 = vld [vmem:[#allocation7 + $0x28] sm:$0xf]
    %v1664 = vld [vmem:[#allocation7 + $0x2c] sm:$0xf]
    %v1665 = vld [vmem:[#allocation7 + $0x30] sm:$0xf]
    %v1666 = vld [vmem:[#allocation7 + $0x34] sm:$0xf]
    %v1667 = vld [vmem:[#allocation7 + $0x38] sm:$0xf]
    %v1668 = vld [vmem:[#allocation7 + $0x3c] sm:$0xf]
    %v1669 = vld [vmem:[#allocation7 + $0x40] sm:$0xf]
    %v1670 = vld [vmem:[#allocation7 + $0x44] sm:$0xf]
    %v1671 = vld [vmem:[#allocation7 + $0x48] sm:$0xf]
    %v1672 = vld [vmem:[#allocation7 + $0x4c] sm:$0xf]
    %v1673 = vld [vmem:[#allocation7 + $0x50] sm:$0xf]
    %v1674 = vld [vmem:[#allocation7 + $0x54] sm:$0xf]
    %v1675 = vld [vmem:[#allocation7 + $0x58] sm:$0xf]
    %v1676 = vld [vmem:[#allocation7 + $0x5c] sm:$0xf]
    %v1677 = vld [vmem:[#allocation7 + $0x60] sm:$0xf]
    %v1678 = vld [vmem:[#allocation7 + $0x64] sm:$0xf]
    %v1679 = vld [vmem:[#allocation7 + $0x68] sm:$0xf]
    %v1680 = vld [vmem:[#allocation7 + $0x6c] sm:$0xf]
    %v1681 = vld [vmem:[#allocation7 + $0x70] sm:$0xf]
    %v1682 = vld [vmem:[#allocation7 + $0x74] sm:$0xf]
    %v1683 = vld [vmem:[#allocation7 + $0x78] sm:$0xf]
    %v1684 = vld [vmem:[#allocation7 + $0x7c] sm:$0xf]
    %v1685 = vld [vmem:[#allocation7 + $0x80] sm:$0xf]
    %v1686 = vld [vmem:[#allocation7 + $0x84] sm:$0xf]
    %v1687 = vld [vmem:[#allocation7 + $0x88] sm:$0xf]
    %v1688 = vld [vmem:[#allocation7 + $0x8c] sm:$0xf]
    %v1689 = vld [vmem:[#allocation7 + $0x90] sm:$0xf]
    %v1690 = vld [vmem:[#allocation7 + $0x94] sm:$0xf]
    %v1691 = vld [vmem:[#allocation7 + $0x98] sm:$0xf]
    %v1692 = vld [vmem:[#allocation7 + $0x9c] sm:$0xf]
    %v1693 = vld [vmem:[#allocation7 + $0xa0] sm:$0xf]
    %v1694 = vld [vmem:[#allocation7 + $0xa4] sm:$0xf]
    %v1695 = vld [vmem:[#allocation7 + $0xa8] sm:$0xf]
    %v1696 = vld [vmem:[#allocation7 + $0xac] sm:$0xf]
    %v1697 = vld [vmem:[#allocation7 + $0xb0] sm:$0xf]
    %v1698 = vld [vmem:[#allocation7 + $0xb4] sm:$0xf]
    %v1699 = vld [vmem:[#allocation7 + $0xb8] sm:$0xf]
    %v1700 = vld [vmem:[#allocation7 + $0xbc] sm:$0xf]
    %v1701 = vld [vmem:[#allocation7 + $0xc0] sm:$0xf]
    %v1702 = vld [vmem:[#allocation7 + $0xc4] sm:$0xf]
    %v1703 = vld [vmem:[#allocation7 + $0xc8] sm:$0xf]
    %v1704 = vld [vmem:[#allocation7 + $0xcc] sm:$0xf]
    %v1705 = vld [vmem:[#allocation7 + $0xd0] sm:$0xf]
    %v1706 = vld [vmem:[#allocation7 + $0xd4] sm:$0xf]
    %v1707 = vld [vmem:[#allocation7 + $0xd8] sm:$0xf]
    %v1708 = vld [vmem:[#allocation7 + $0xdc] sm:$0xf]
    %v1709 = vld [vmem:[#allocation7 + $0xe0] sm:$0xf]
    %v1710 = vld [vmem:[#allocation7 + $0xe4] sm:$0xf]
    %v1711 = vld [vmem:[#allocation7 + $0xe8] sm:$0xf]
    %v1712 = vld [vmem:[#allocation7 + $0xec] sm:$0xf]
    %v1713 = vld [vmem:[#allocation7 + $0xf0] sm:$0xf]
    %v1714 = vld [vmem:[#allocation7 + $0xf4] sm:$0xf]
    %v1715 = vld [vmem:[#allocation7 + $0xf8] sm:$0xf]
    %v1716 = vld [vmem:[#allocation7 + $0xfc] sm:$0xf]
    %v1717 = vld [vmem:[%s4] sm:$0x1]
    %v1719 = vlaneseq
    %v1720 = vshrl.u32 %v1719, 7
    %v1721 = vsub.s32 0, %v1720
    %v1722 = vrot.slane %v1717, %v1721
    %v1788 = vunpack.c.l.b16 %v1653
    %v1789 = vunpack.c.l.b16 %v1654
    %v1790 = vunpack.c.l.b16 %v1655
    %v1791 = vunpack.c.l.b16 %v1656
    %v1792 = vunpack.c.l.b16 %v1657
    %v1793 = vunpack.c.l.b16 %v1658
    %v1794 = vunpack.c.l.b16 %v1659
    %v1795 = vunpack.c.l.b16 %v1660
    %v1796 = vunpack.c.l.b16 %v1661
    %v1797 = vunpack.c.l.b16 %v1662
    %v1798 = vunpack.c.l.b16 %v1663
    %v1799 = vunpack.c.l.b16 %v1664
    %v1800 = vunpack.c.l.b16 %v1665
    %v1801 = vunpack.c.l.b16 %v1666
    %v1802 = vunpack.c.l.b16 %v1667
    %v1803 = vunpack.c.l.b16 %v1668
    %v1804 = vunpack.c.l.b16 %v1669
    %v1805 = vunpack.c.l.b16 %v1670
    %v1806 = vunpack.c.l.b16 %v1671
    %v1807 = vunpack.c.l.b16 %v1672
    %v1808 = vunpack.c.l.b16 %v1673
    %v1809 = vunpack.c.l.b16 %v1674
    %v1810 = vunpack.c.l.b16 %v1675
    %v1811 = vunpack.c.l.b16 %v1676
    %v1812 = vunpack.c.l.b16 %v1677
    %v1813 = vunpack.c.l.b16 %v1678
    %v1814 = vunpack.c.l.b16 %v1679
    %v1815 = vunpack.c.l.b16 %v1680
    %v1816 = vunpack.c.l.b16 %v1681
    %v1817 = vunpack.c.l.b16 %v1682
    %v1818 = vunpack.c.l.b16 %v1683
    %v1819 = vunpack.c.l.b16 %v1684
    %v1820 = vunpack.c.l.b16 %v1685
    %v1821 = vunpack.c.l.b16 %v1686
    %v1822 = vunpack.c.l.b16 %v1687
    %v1823 = vunpack.c.l.b16 %v1688
    %v1824 = vunpack.c.l.b16 %v1689
    %v1825 = vunpack.c.l.b16 %v1690
    %v1826 = vunpack.c.l.b16 %v1691
    %v1827 = vunpack.c.l.b16 %v1692
    %v1828 = vunpack.c.l.b16 %v1693
    %v1829 = vunpack.c.l.b16 %v1694
    %v1830 = vunpack.c.l.b16 %v1695
    %v1831 = vunpack.c.l.b16 %v1696
    %v1832 = vunpack.c.l.b16 %v1697
    %v1833 = vunpack.c.l.b16 %v1698
    %v1834 = vunpack.c.l.b16 %v1699
    %v1835 = vunpack.c.l.b16 %v1700
    %v1836 = vunpack.c.l.b16 %v1701
    %v1837 = vunpack.c.l.b16 %v1702
    %v1838 = vunpack.c.l.b16 %v1703
    %v1839 = vunpack.c.l.b16 %v1704
    %v1840 = vunpack.c.l.b16 %v1705
    %v1841 = vunpack.c.l.b16 %v1706
    %v1842 = vunpack.c.l.b16 %v1707
    %v1843 = vunpack.c.l.b16 %v1708
    %v1844 = vunpack.c.l.b16 %v1709
    %v1845 = vunpack.c.l.b16 %v1710
    %v1846 = vunpack.c.l.b16 %v1711
    %v1847 = vunpack.c.l.b16 %v1712
    %v1848 = vunpack.c.l.b16 %v1713
    %v1849 = vunpack.c.l.b16 %v1714
    %v1850 = vunpack.c.l.b16 %v1715
    %v1851 = vunpack.c.l.b16 %v1716
    %v1852 = vpack.c.b16 %v1789, %v1788
    %v1853 = vpack.c.b16 %v1791, %v1790
    %v1854 = vpack.c.b16 %v1793, %v1792
    %v1855 = vpack.c.b16 %v1795, %v1794
    %v1856 = vpack.c.b16 %v1797, %v1796
    %v1857 = vpack.c.b16 %v1799, %v1798
    %v1858 = vpack.c.b16 %v1801, %v1800
    %v1859 = vpack.c.b16 %v1803, %v1802
    %v1860 = vpack.c.b16 %v1805, %v1804
    %v1861 = vpack.c.b16 %v1807, %v1806
    %v1862 = vpack.c.b16 %v1809, %v1808
    %v1863 = vpack.c.b16 %v1811, %v1810
    %v1864 = vpack.c.b16 %v1813, %v1812
    %v1865 = vpack.c.b16 %v1815, %v1814
    %v1866 = vpack.c.b16 %v1817, %v1816
    %v1867 = vpack.c.b16 %v1819, %v1818
    %v1868 = vpack.c.b16 %v1821, %v1820
    %v1869 = vpack.c.b16 %v1823, %v1822
    %v1870 = vpack.c.b16 %v1825, %v1824
    %v1871 = vpack.c.b16 %v1827, %v1826
    %v1872 = vpack.c.b16 %v1829, %v1828
    %v1873 = vpack.c.b16 %v1831, %v1830
    %v1874 = vpack.c.b16 %v1833, %v1832
    %v1875 = vpack.c.b16 %v1835, %v1834
    %v1876 = vpack.c.b16 %v1837, %v1836
    %v1877 = vpack.c.b16 %v1839, %v1838
    %v1878 = vpack.c.b16 %v1841, %v1840
    %v1879 = vpack.c.b16 %v1843, %v1842
    %v1880 = vpack.c.b16 %v1845, %v1844
    %v1881 = vpack.c.b16 %v1847, %v1846
    %v1882 = vpack.c.b16 %v1849, %v1848
    %v1883 = vpack.c.b16 %v1851, %v1850
    %1916 = vmatprep.subr.bf16.mxu0 0
    %1917 = vmatpush1.bf16.msra.mxu0 %v1852
    %1918 = vmatprep.subr.bf16.mxu0 0
    %1919 = vmatpush1.bf16.msra.mxu0 %v1853
    %1920 = vmatprep.subr.bf16.mxu0 0
    %1921 = vmatpush1.bf16.msra.mxu0 %v1854
    %1922 = vmatprep.subr.bf16.mxu0 0
    %1923 = vmatpush1.bf16.msra.mxu0 %v1855
    %1924 = vmatprep.subr.bf16.mxu0 0
    %1925 = vmatpush1.bf16.msra.mxu0 %v1856
    %1926 = vmatprep.subr.bf16.mxu0 0
    %1927 = vmatpush1.bf16.msra.mxu0 %v1857
    %1928 = vmatprep.subr.bf16.mxu0 0
    %1929 = vmatpush1.bf16.msra.mxu0 %v1858
    %1930 = vmatprep.subr.bf16.mxu0 0
    %1931 = vmatpush1.bf16.msra.mxu0 %v1859
    %1932 = vmatprep.subr.bf16.mxu0 0
    %1933 = vmatpush1.bf16.msra.mxu0 %v1860
    %1934 = vmatprep.subr.bf16.mxu0 0
    %1935 = vmatpush1.bf16.msra.mxu0 %v1861
    %1936 = vmatprep.subr.bf16.mxu0 0
    %1937 = vmatpush1.bf16.msra.mxu0 %v1862
    %1938 = vmatprep.subr.bf16.mxu0 0
    %1939 = vmatpush1.bf16.msra.mxu0 %v1863
    %1940 = vmatprep.subr.bf16.mxu0 0
    %1941 = vmatpush1.bf16.msra.mxu0 %v1864
    %1942 = vmatprep.subr.bf16.mxu0 0
    %1943 = vmatpush1.bf16.msra.mxu0 %v1865
    %1944 = vmatprep.subr.bf16.mxu0 0
    %1945 = vmatpush1.bf16.msra.mxu0 %v1866
    %1946 = vmatprep.subr.bf16.mxu0 0
    %1947 = vmatpush1.bf16.msra.mxu0 %v1867
    %1948 = vmatprep.mubr.bf16.mxu0 %v1650
    %1949 = vmatmul.mubr.bf16.gmra.mrb[0].mxu0 %v1649
    %v1950 = vpop.f32.mrb[0].mxu0
    %v1951 = vadd.f32 %v1722, %v1950
    %v1952 = vpop.f32.mrb[0].mxu0
    %v1953 = vpop.f32.mrb[0].mxu0
    %v1954 = vpop.f32.mrb[0].mxu0
    %1955 = vdwg.mxu0
    %1956 = vmatprep.subr.bf16.mxu0 0
    %1957 = vmatpush1.bf16.msra.mxu0 %v1868
    %1958 = vmatprep.subr.bf16.mxu0 0
    %1959 = vmatpush1.bf16.msra.mxu0 %v1869
    %1960 = vmatprep.subr.bf16.mxu0 0
    %1961 = vmatpush1.bf16.msra.mxu0 %v1870
    %1962 = vmatprep.subr.bf16.mxu0 0
    %1963 = vmatpush1.bf16.msra.mxu0 %v1871
    %1964 = vmatprep.subr.bf16.mxu0 0
    %1965 = vmatpush1.bf16.msra.mxu0 %v1872
    %1966 = vmatprep.subr.bf16.mxu0 0
    %1967 = vmatpush1.bf16.msra.mxu0 %v1873
    %1968 = vmatprep.subr.bf16.mxu0 0
    %1969 = vmatpush1.bf16.msra.mxu0 %v1874
    %1970 = vmatprep.subr.bf16.mxu0 0
    %1971 = vmatpush1.bf16.msra.mxu0 %v1875
    %1972 = vmatprep.subr.bf16.mxu0 0
    %1973 = vmatpush1.bf16.msra.mxu0 %v1876
    %1974 = vmatprep.subr.bf16.mxu0 0
    %1975 = vmatpush1.bf16.msra.mxu0 %v1877
    %1976 = vmatprep.subr.bf16.mxu0 0
    %1977 = vmatpush1.bf16.msra.mxu0 %v1878
    %1978 = vmatprep.subr.bf16.mxu0 0
    %1979 = vmatpush1.bf16.msra.mxu0 %v1879
    %1980 = vmatprep.subr.bf16.mxu0 0
    %1981 = vmatpush1.bf16.msra.mxu0 %v1880
    %1982 = vmatprep.subr.bf16.mxu0 0
    %1983 = vmatpush1.bf16.msra.mxu0 %v1881
    %1984 = vmatprep.subr.bf16.mxu0 0
    %1985 = vmatpush1.bf16.msra.mxu0 %v1882
    %1986 = vmatprep.subr.bf16.mxu0 0
    %1987 = vmatpush1.bf16.msra.mxu0 %v1883
    %1988 = vmatprep.mubr.bf16.mxu0 %v1652
    %1989 = vmatmul.mubr.bf16.gmra.mrb[0].mxu0 %v1651
    %v1990 = vpop.f32.mrb[0].mxu0
    %v1991 = vadd.f32 %v1951, %v1990
    %v1992 = vpop.f32.mrb[0].mxu0
    %v1993 = vpop.f32.mrb[0].mxu0
    %v1994 = vpop.f32.mrb[0].mxu0
    %1995 = vdwg.mxu0
    %v1996 = vmax.f32 %v1991, 0.0
    %v1997 = vrot.slane %v1996, 4
    %v1998 = vadd.f32 %v1996, %v1997
    %v1999 = vrot.slane %v1998, 2
    %v2000 = vadd.f32 %v1998, %v1999
    %v2001 = vrot.slane %v2000, 1
    %v2002 = vadd.f32 %v2000, %v2001
    %v2003 = vrcp.pop 8.0
    %v2004 = vmul.f32 %v2002, %v2003
    %v2005 = vmul.f32 %v1996, %v1996
    %v2006 = vrot.slane %v2005, 4
    %v2007 = vadd.f32 %v2005, %v2006
    %v2008 = vrot.slane %v2007, 2
    %v2009 = vadd.f32 %v2007, %v2008
    %v2010 = vrot.slane %v2009, 1
    %v2011 = vadd.f32 %v2009, %v2010
    %v2012 = vmul.f32 %v2011, %v2003
    %v2013 = vmul.f32 %v2004, %v2004
    %v2014 = vsub.f32 %v2012, %v2013
    %v2015 = vmax.f32 %v2014, 0.0
    %v2016 = vsub.f32 %v1996, %v2004
    %v2017 = vadd.f32 %v2015, 1e-05
    %v2018 = vrsqrt.pop %v2017
    %v2019 = vmul.f32 %v2016, %v2018
    %v2020 = vld [vmem:[%s5] sm:$0x1]
    %v2022 = vlaneseq
    %v2023 = vshrl.u32 %v2022, 7
    %v2024 = vsub.s32 0, %v2023
    %v2025 = vrot.slane %v2020, %v2024
    %v2027 = vmul.f32 %v2019, %v2025
    %v2028 = vld [vmem:[%s6] sm:$0x1]
    %v2030 = vlaneseq
    %v2031 = vshrl.u32 %v2030, 7
    %v2032 = vsub.s32 0, %v2031
    %v2033 = vrot.slane %v2028, %v2032
    %v2035 = vadd.f32 %v2027, %v2033
    %v2036 = vmax.f32 %v2035, 0.0
    %v2037 = vpack.c.bf16 %v2036, %v2036
    %v2038 = vld [vmem:[#allocation8] sm:$0xf]
    %v2039 = vld [vmem:[#allocation8 + $0x4] sm:$0xf]
    %v2040 = vld [vmem:[#allocation8 + $0x8] sm:$0xf]
    %v2041 = vld [vmem:[#allocation8 + $0xc] sm:$0xf]
    %v2042 = vld [vmem:[#allocation8 + $0x10] sm:$0xf]
    %v2043 = vld [vmem:[#allocation8 + $0x14] sm:$0xf]
    %v2044 = vld [vmem:[#allocation8 + $0x18] sm:$0xf]
    %v2045 = vld [vmem:[#allocation8 + $0x1c] sm:$0xf]
    %v2046 = vld [vmem:[#allocation8 + $0x20] sm:$0xf]
    %v2047 = vld [vmem:[#allocation8 + $0x24] sm:$0xf]
    %v2048 = vld [vmem:[#allocation8 + $0x28] sm:$0xf]
    %v2049 = vld [vmem:[#allocation8 + $0x2c] sm:$0xf]
    %v2050 = vld [vmem:[#allocation8 + $0x30] sm:$0xf]
    %v2051 = vld [vmem:[#allocation8 + $0x34] sm:$0xf]
    %v2052 = vld [vmem:[#allocation8 + $0x38] sm:$0xf]
    %v2053 = vld [vmem:[#allocation8 + $0x3c] sm:$0xf]
    %v2054 = vld [vmem:[%s8] sm:$0x1]
    %v2056 = vlaneseq
    %v2057 = vshrl.u32 %v2056, 7
    %v2058 = vsub.s32 0, %v2057
    %v2059 = vrot.slane %v2054, %v2058
    %v2077 = vunpack.c.l.b16 %v2038
    %v2078 = vunpack.c.l.b16 %v2039
    %v2079 = vunpack.c.l.b16 %v2040
    %v2080 = vunpack.c.l.b16 %v2041
    %v2081 = vunpack.c.l.b16 %v2042
    %v2082 = vunpack.c.l.b16 %v2043
    %v2083 = vunpack.c.l.b16 %v2044
    %v2084 = vunpack.c.l.b16 %v2045
    %v2085 = vunpack.c.l.b16 %v2046
    %v2086 = vunpack.c.l.b16 %v2047
    %v2087 = vunpack.c.l.b16 %v2048
    %v2088 = vunpack.c.l.b16 %v2049
    %v2089 = vunpack.c.l.b16 %v2050
    %v2090 = vunpack.c.l.b16 %v2051
    %v2091 = vunpack.c.l.b16 %v2052
    %v2092 = vunpack.c.l.b16 %v2053
    %v2093 = vpack.c.b16 %v2078, %v2077
    %v2094 = vpack.c.b16 %v2080, %v2079
    %v2095 = vpack.c.b16 %v2082, %v2081
    %v2096 = vpack.c.b16 %v2084, %v2083
    %v2097 = vpack.c.b16 %v2086, %v2085
    %v2098 = vpack.c.b16 %v2088, %v2087
    %v2099 = vpack.c.b16 %v2090, %v2089
    %v2100 = vpack.c.b16 %v2092, %v2091
    %2109 = vmatprep.subr.bf16.mxu0 0
    %2110 = vmatpush1.bf16.msra.mxu0 %v2093
    %2111 = vmatprep.subr.bf16.mxu0 0
    %2112 = vmatpush1.bf16.msra.mxu0 %v2094
    %2113 = vmatprep.subr.bf16.mxu0 0
    %2114 = vmatpush1.bf16.msra.mxu0 %v2095
    %2115 = vmatprep.subr.bf16.mxu0 0
    %2116 = vmatpush1.bf16.msra.mxu0 %v2096
    %2117 = vmatprep.subr.bf16.mxu0 0
    %2118 = vmatpush1.bf16.msra.mxu0 %v2097
    %2119 = vmatprep.subr.bf16.mxu0 0
    %2120 = vmatpush1.bf16.msra.mxu0 %v2098
    %2121 = vmatprep.subr.bf16.mxu0 0
    %2122 = vmatpush1.bf16.msra.mxu0 %v2099
    %2123 = vmatprep.subr.bf16.mxu0 0
    %2124 = vmatpush1.bf16.msra.mxu0 %v2100
    %2125 = vmatprep.subr.bf16.mxu0 0
    %2126 = vmatpush1.bf16.msra.mxu0 0
    %2127 = vmatprep.subr.bf16.mxu0 0
    %2128 = vmatpush1.bf16.msra.mxu0 0
    %2129 = vmatprep.subr.bf16.mxu0 0
    %2130 = vmatpush1.bf16.msra.mxu0 0
    %2131 = vmatprep.subr.bf16.mxu0 0
    %2132 = vmatpush1.bf16.msra.mxu0 0
    %2133 = vmatprep.subr.bf16.mxu0 0
    %2134 = vmatpush1.bf16.msra.mxu0 0
    %2135 = vmatprep.subr.bf16.mxu0 0
    %2136 = vmatpush1.bf16.msra.mxu0 0
    %2137 = vmatprep.subr.bf16.mxu0 0
    %2138 = vmatpush1.bf16.msra.mxu0 0
    %2139 = vmatprep.subr.bf16.mxu0 0
    %2140 = vmatpush1.bf16.msra.mxu0 0
    %2141 = vmatprep.mubr.bf16.mxu0 0
    %2142 = vmatmul.mubr.bf16.gmra.mrb[0].mxu0 %v2037
    %v2143 = vpop.f32.mrb[0].mxu0
    %v2144 = vadd.f32 %v2059, %v2143
    %v2145 = vpop.f32.mrb[0].mxu0
    %v2146 = vpop.f32.mrb[0].mxu0
    %v2147 = vpop.f32.mrb[0].mxu0
    %2148 = vdwg.mxu0
    %2149 = vmax.xlane.f32.xlu0 %v2144
    %v2150 = vpop.xlane.xlu0 %2149
    %v2151 = vsub.f32 %v2144, %v2150
    %v2152 = vmul.f32 %v2151, 1.442695
    %v2153 = vpow.pop %v2152
    %2154 = vadd.xlane.f32.xlu0 %v2153
    %v2155 = vpop.xlane.xlu0 %2154
    %v2156 = vlog2.pop %v2155
    %v2157 = vmul.f32 %v2156, 0.6931472
    %v2158 = vsub.f32 %v2151, %v2157
    %2159 = vst [vmem:[#allocation10] sm:$0xff] %v2158
    // Predicated region
    $region54: #{tpu_custom_call.1} parent=1 // pred_check
      _
    $region55: #{tpu_custom_call.1} parent=1 // pred_check_branch
      %2161 = sbr.rel (0) target = $region57
    $region56: #{tpu_custom_call.1} parent=1 // pred_region
      %s2163 = ssub.s32 128, 128
      %2164 = vsyncadd [#allocation4], %s2163
      %s2166 = sshll.u32 [#allocation10], 4
      %s2167 = int_to_ptr.vmem [resolvable:$true] %s2166
      %2169 = dma.vmem_to_hbm [thread:$0]  %s2167, 128, %s9, [#allocation4]
    $region57: #{tpu_custom_call.1} parent=1 // pred_fallthru
      _
    // Predicated region
    $region58: #{tpu_custom_call.1} parent=1 // pred_check
      _
    $region59: #{tpu_custom_call.1} parent=1 // pred_check_branch
      %2171 = sbr.rel (0) target = $region61
    $region60: #{tpu_custom_call.1} parent=1 // pred_region
      %2172 = dma.done [#allocation4], 128
    $region61: #{tpu_custom_call.1} parent=1 // pred_fallthru
      _
    %2173 = vsyncpa [#allocation3], 1
    %2174 = vsyncpa [#allocation6], 1
    %2175 = vsyncpa [#allocation9], 1
    %2176 = vsyncpa [#allocation4], 1

</llo_original>
